<compile_context>
chip_gen: v7x
topology: tpu7x:2x2x1
jax: 0.10.0
libtpu: 0.0.40
codegen_flags: <defaults>
</compile_context>

<pallas_src>
import jax
import jax.numpy as jnp
from jax import lax
from jax.experimental import pallas as pl
from jax.experimental.pallas import tpu as pltpu

K = 4
INPUT_SIZE = 3 * K   # 12
OUTPUT_SIZE = K      # 4
H1, H2, H3 = 64, 32, 16
BN_EPS = 1e-5

# Row offsets of each [out, in] weight inside the packed [116, 64] bf16 slab
# (0 / 64 / 96 / 112 all sit on 16-row bf16 sublane-pack boundaries).
_W_ROWS = (0, H1, H1 + H2, H1 + H2 + H3, H1 + H2 + H3 + OUTPUT_SIZE)  # 0,64,96,112,116


def _build_kernel(n_chunks: int, chunk: int, batch: int):
    inv_b = 1.0 / batch

    def kernel(x_ref, wp_ref, vp_ref, o_ref, h1_ref, s1_ref, ss1_ref):
        # x_ref : [chunk, 12] f32   (auto-pipelined batch chunk, natural x layout)
        # wp_ref: [116, 64]  bf16   packed weights (resident)
        # vp_ref: [64, 8]    f32    packed gammas/betas/b4 (resident)
        # o_ref : [4, batch] f32    lane-dense output, written at the last step
        # h1_ref: [64, batch] bf16  persistent layer-1 pre-activations
        # s1_ref/ss1_ref: [64, 1] f32  BN1 sum / sum-of-squares accumulators
        step = pl.program_id(0)

        @pl.when(step == 0)
        def _init():
            s1_ref[...] = jnp.zeros_like(s1_ref)
            ss1_ref[...] = jnp.zeros_like(ss1_ref)

        # ---- layer 1 on this chunk (x DMA for the next chunk is prefetched) ----
        w1 = wp_ref[_W_ROWS[0]:_W_ROWS[1], 0:INPUT_SIZE]          # [64, 12] bf16
        xc = x_ref[...].astype(jnp.bfloat16)                       # [chunk, 12]
        # h1c = w1 @ xc^T : contract the last dims -> feature-major [64, chunk]
        h1c = lax.dot_general(w1, xc, (((1,), (1,)), ((), ())),
                              preferred_element_type=jnp.float32)

        # BN1 statistics (biased variance) accumulated across chunks, in f32.
        # TODO(synk): these lane-axis reductions could ride the near-idle MXU
        # (dot with a ones column) for a small extra VALU/XLU win.
        s1_ref[...] += jnp.sum(h1c, axis=-1, keepdims=True)
        ss1_ref[...] += jnp.sum(h1c * h1c, axis=-1, keepdims=True)

        # Persist the pre-activation in bf16 (the fc2 matmul consumes bf16 anyway).
        h1c_bf = h1c.astype(jnp.bfloat16)
        if n_chunks == 1:
            h1_ref[...] = h1c_bf
        else:
            # Static-sliced, pl.when-guarded column stores: avoids dynamic indexing
            # on the minormost (lane) dim; chunk is a multiple of 128 so every store
            # is lane-aligned and unmasked.
            for c in range(n_chunks):
                @pl.when(step == c)
                def _store(c=c):
                    h1_ref[:, c * chunk:(c + 1) * chunk] = h1c_bf

        # ---- last chunk: BN1 over the whole batch, then layers 2..4 ----
        @pl.when(step == n_chunks - 1)
        def _finalize():
            g1, be1 = vp_ref[0:H1, 0:1], vp_ref[0:H1, 1:2]
            g2, be2 = vp_ref[0:H2, 2:3], vp_ref[0:H2, 3:4]
            g3, be3 = vp_ref[0:H3, 4:5], vp_ref[0:H3, 5:6]
            b4 = vp_ref[0:OUTPUT_SIZE, 6:7]

            def scale_shift(s, ss, gamma, beta):
                mean = s * inv_b
                var = jnp.maximum(ss * inv_b - mean * mean, 0.0)
                sc = gamma * lax.rsqrt(var + BN_EPS)               # [F, 1]
                return sc, beta - mean * sc                        # [F, 1]

            def bn_relu(h, gamma, beta):
                # One stats sweep + one FMA/ReLU sweep; bf16 out for the next matmul.
                s = jnp.sum(h, axis=-1, keepdims=True)
                ss = jnp.sum(h * h, axis=-1, keepdims=True)
                sc, sh = scale_shift(s, ss, gamma, beta)
                return jnp.maximum(h * sc + sh, 0.0).astype(jnp.bfloat16)

            # BN1 + ReLU applied to the persistent bf16 slab.
            sc1, sh1 = scale_shift(s1_ref[...], ss1_ref[...], g1, be1)
            a1 = jnp.maximum(h1_ref[...].astype(jnp.float32) * sc1 + sh1,
                             0.0).astype(jnp.bfloat16)             # [64, B] bf16

            w2 = wp_ref[_W_ROWS[1]:_W_ROWS[2], 0:H1]               # [32, 64]
            a2 = bn_relu(jnp.dot(w2, a1, preferred_element_type=jnp.float32),
                         g2, be2)                                  # [32, B] bf16
            w3 = wp_ref[_W_ROWS[2]:_W_ROWS[3], 0:H2]               # [16, 32]
            a3 = bn_relu(jnp.dot(w3, a2, preferred_element_type=jnp.float32),
                         g3, be3)                                  # [16, B] bf16
            w4 = wp_ref[_W_ROWS[3]:_W_ROWS[4], 0:H3]               # [ 4, 16]
            h4 = jnp.dot(w4, a3, preferred_element_type=jnp.float32) + b4
            o_ref[...] = jnp.maximum(h4, 0.0)                      # [4, B] lane-dense

    return kernel


def _pick_chunk(batch: int) -> int:
    """Lane-dense batch chunk (multiple of 128) for streaming x; full batch if no
    clean multiple divides it."""
    for bc in (4096, 2048, 1024, 512, 256, 128):
        if batch % bc == 0 and batch // bc >= 2:
            return bc
    # TODO(synk): ragged last-chunk masking for very large batches not divisible
    # by 128 (falls back to a single un-pipelined block today).
    return batch


def _vmem_limit_bytes(batch: int, chunk: int) -> int:
    # Streaming peak ~ chunk * (96 x-f32 dbl-buf + 24 x-bf16 + 512 h1c f32 temps
    #                  + 128 h1c bf16) + 128*batch persistent h1 slab.
    # Finalize peak  ~ batch * (128 h1 bf16 + 512 f32 BN-apply temps + 128 a1 bf16
    #                  + ~64 layer-2/3 temps).
    need = batch * 832 + chunk * 768 + (8 << 20)     # + weights/vectors/compiler margin
    try:
        cap = int(pltpu.get_tpu_info().vmem_capacity_bytes)
    except Exception:
        cap = 64 << 20                               # v7x physical floor; safe everywhere
    return int(max(min(need, cap - (4 << 20)), 4 << 20))


def pack_params(params):
    """Pack the 4 weights into one bf16 [116, 64] slab and the 7 small vectors into
    one f32 [64, 8] slab.  Call ONCE at init; the forward reuses the slabs."""
    def pad_w(w):
        out_f, in_f = w.shape
        return jnp.pad(w, ((0, 0), (0, H1 - in_f)))
    wpack = jnp.concatenate(
        [pad_w(params["w1"]), pad_w(params["w2"]),
         pad_w(params["w3"]), pad_w(params["w4"])], axis=0).astype(jnp.bfloat16)

    def col(v):
        v = v.reshape(-1).astype(jnp.float32)
        return jnp.pad(v, (0, H1 - v.shape[0]))[:, None]
    vpack = jnp.concatenate(
        [col(params["g1"]), col(params["be1"]),
         col(params["g2"]), col(params["be2"]),
         col(params["g3"]), col(params["be3"]),
         col(params["b4"]), jnp.zeros((H1, 1), jnp.float32)], axis=1)
    return wpack, vpack


@jax.jit
def congestion_forward(x, wpack, vpack):
    """x: [B, INPUT_SIZE] f32, packed slabs from pack_params() -> [B, OUTPUT_SIZE] f32."""
    batch = x.shape[0]
    chunk = _pick_chunk(batch)
    n_chunks = batch // chunk

    grid_spec = pltpu.PrefetchScalarGridSpec(
        num_scalar_prefetch=0,
        grid=(n_chunks,),
        in_specs=[
            pl.BlockSpec((chunk, INPUT_SIZE), lambda i: (i, 0)),   # streamed x chunks
            pl.BlockSpec((_W_ROWS[-1], H1), lambda i: (0, 0)),     # resident weights
            pl.BlockSpec((H1, 8), lambda i: (0, 0)),               # resident vectors
        ],
        out_specs=pl.BlockSpec((OUTPUT_SIZE, batch), lambda i: (0, 0)),
        scratch_shapes=[
            pltpu.VMEM((H1, batch), jnp.bfloat16),   # persistent layer-1 pre-acts
            pltpu.VMEM((H1, 1), jnp.float32),        # BN1 sum
            pltpu.VMEM((H1, 1), jnp.float32),        # BN1 sum of squares
        ],
    )
    out_t = pl.pallas_call(
        _build_kernel(n_chunks, chunk, batch),
        out_shape=jax.ShapeDtypeStruct((OUTPUT_SIZE, batch), jnp.float32),
        grid_spec=grid_spec,
        compiler_params=pltpu.CompilerParams(
            dimension_semantics=("arbitrary",),      # stats are carried across chunks
            vmem_limit_bytes=_vmem_limit_bytes(batch, chunk),
        ),
    )(x.astype(jnp.float32), wpack, vpack)
    # 16*B-byte transpose (vs 48*B for the removed input transpose); drop it if the
    # consumer accepts the feature-major [4, B] layout.
    return out_t.T


def init_params(key):
    """Kaiming-normal (fan_in, relu) weights in PyTorch [out, in] layout, zero biases,
    BN gamma=1 / beta=0 -- mirrors Congestion.init_weights()."""
    dims = [(INPUT_SIZE, H1), (H1, H2), (H2, H3), (H3, OUTPUT_SIZE)]
    params = {}
    keys = jax.random.split(key, len(dims))
    for i, ((fan_in, fan_out), k) in enumerate(zip(dims, keys), start=1):
        std = (2.0 / fan_in) ** 0.5
        params[f"w{i}"] = (std * jax.random.normal(k, (fan_out, fan_in))).astype(jnp.float32)
        params[f"b{i}"] = jnp.zeros((fan_out,), jnp.float32)
    for i, h in zip((1, 2, 3), (H1, H2, H3)):
        params[f"g{i}"] = jnp.ones((h,), jnp.float32)
        params[f"be{i}"] = jnp.zeros((h,), jnp.float32)
    return params


def congestion_reference(x, params):
    """Pure-JAX reference with the kernel's precision policy (bf16 matmul inputs,
    f32 accumulation/BN math, bf16 persistence of the layer-1 pre-activation)."""
    def dot(h, w):  # h: [B, in], w: [out, in]
        return jnp.dot(h.astype(jnp.bfloat16), w.astype(jnp.bfloat16).T,
                       preferred_element_type=jnp.float32)

    def bn(h, g, b):
        mean = jnp.mean(h, axis=0, keepdims=True)
        var = jnp.mean((h - mean) ** 2, axis=0, keepdims=True)
        return (h - mean) * lax.rsqrt(var + BN_EPS) * g + b

    h1 = dot(x, params["w1"]) + params["b1"]
    h1 = h1.astype(jnp.bfloat16).astype(jnp.float32)   # mirrors bf16 h1 persistence
    h = jnp.maximum(bn(h1, params["g1"], params["be1"]), 0.0)
    h = jnp.maximum(bn(dot(h, params["w2"]) + params["b2"], params["g2"], params["be2"]), 0.0)
    h = jnp.maximum(bn(dot(h, params["w3"]) + params["b3"], params["g3"], params["be3"]), 0.0)
    h = jnp.maximum(dot(h, params["w4"]) + params["b4"], 0.0)
    return h


if __name__ == "__main__":
    key = jax.random.PRNGKey(0)
    pkey, xkey = jax.random.split(key)
    params = init_params(pkey)
    wpack, vpack = pack_params(params)     # packed ONCE at init, reused per call

    B = 1024                               # two 512-lane chunks: exercises streaming
    x = jax.random.normal(xkey, (B, INPUT_SIZE), dtype=jnp.float32)

    out = congestion_forward(x, wpack, vpack)
    jax.block_until_ready(out)
    assert out.shape == (B, OUTPUT_SIZE) and out.dtype == jnp.float32

    ref = congestion_reference(x, params)
    max_err = float(jnp.max(jnp.abs(out - ref)))
    assert jnp.allclose(out, ref, atol=2e-2, rtol=2e-2), f"max abs err {max_err}"

    print("KERNEL_OK")
</pallas_src>

<mosaic_0001>
module attributes {stable_mosaic.version = 11 : i64} {
  func.func @kernel(%arg0: i32, %arg1: memref<512x12xf32, #tpu.memory_space<vmem>>, %arg2: memref<116x64xbf16, #tpu.memory_space<vmem>>, %arg3: memref<64x8xf32, #tpu.memory_space<vmem>>, %arg4: memref<4x1024xf32, #tpu.memory_space<vmem>>, %arg5: memref<64x1024xbf16, #tpu.memory_space<vmem>>, %arg6: memref<64x1xf32, #tpu.memory_space<vmem>>, %arg7: memref<64x1xf32, #tpu.memory_space<vmem>>) attributes {dimension_semantics = [#tpu.dimension_semantics<arbitrary>], iteration_bounds = array<i64: 2>, scalar_prefetch = 0 : i64, scratch_operands = 3 : i64, tpu.core_type = #tpu.core_type<tc>, window_params = [{transform_indices = @transform_0, window_bounds = array<i64: 512, 12>}, {pipeline_mode = #tpu.pipeline_mode<synchronous>, transform_indices = @transform_1, window_bounds = array<i64: 116, 64>}, {pipeline_mode = #tpu.pipeline_mode<synchronous>, transform_indices = @transform_2, window_bounds = array<i64: 64, 8>}, {pipeline_mode = #tpu.pipeline_mode<synchronous>, transform_indices = @transform_3, window_bounds = array<i64: 4, 1024>}]} {
    %c0_i32 = arith.constant 0 : i32
    %0 = arith.cmpi eq, %arg0, %c0_i32 : i32
    %1 = arith.extui %0 : i1 to i32
    %c0_i32_0 = arith.constant 0 : i32
    %2 = arith.cmpi ne, %1, %c0_i32_0 : i32
    scf.if %2 {
      %cst_19 = arith.constant 0.000000e+00 : f32
      %28 = vector.broadcast %cst_19 : f32 to vector<64x1xf32>
      %c0_20 = arith.constant 0 : index
      %c0_21 = arith.constant 0 : index
      %29 = vector.load %arg6[%c0_20, %c0_21] : memref<64x1xf32, #tpu.memory_space<vmem>>, vector<64x1xf32>
      tpu.vector_store %arg6[%c0_20, %c0_21], %28 {strides = array<i32>} : memref<64x1xf32, #tpu.memory_space<vmem>>, vector<64x1xf32>,
      %cst_22 = arith.constant 0.000000e+00 : f32
      %30 = vector.broadcast %cst_22 : f32 to vector<64x1xf32>
      %c0_23 = arith.constant 0 : index
      %c0_24 = arith.constant 0 : index
      %31 = vector.load %arg7[%c0_23, %c0_24] : memref<64x1xf32, #tpu.memory_space<vmem>>, vector<64x1xf32>
      tpu.vector_store %arg7[%c0_23, %c0_24], %30 {strides = array<i32>} : memref<64x1xf32, #tpu.memory_space<vmem>>, vector<64x1xf32>,
    } else {
    }
    %c0 = arith.constant 0 : index
    %c0_1 = arith.constant 0 : index
    %3 = vector.load %arg2[%c0, %c0_1] : memref<116x64xbf16, #tpu.memory_space<vmem>>, vector<64x12xbf16>
    %c0_2 = arith.constant 0 : index
    %c0_3 = arith.constant 0 : index
    %4 = vector.load %arg1[%c0_2, %c0_3] : memref<512x12xf32, #tpu.memory_space<vmem>>, vector<512x12xf32>
    %5 = arith.truncf %4 : vector<512x12xf32> to vector<512x12xbf16>
    %cst = arith.constant dense<0.000000e+00> : vector<64x512xf32>
    %6 = tpu.matmul %3, %5, %cst {dimension_numbers = #tpu.dot_dimension_numbers<[1], [1], [0], [0], [0, 0, 1, 0], [], []>} : vector<64x12xbf16>, vector<512x12xbf16>, vector<64x512xf32> -> vector<64x512xf32>
    %c0_4 = arith.constant 0 : index
    %c0_5 = arith.constant 0 : index
    %7 = vector.load %arg6[%c0_4, %c0_5] : memref<64x1xf32, #tpu.memory_space<vmem>>, vector<64x1xf32>
    %cst_6 = arith.constant dense<0.000000e+00> : vector<64xf32>
    %8 = vector.multi_reduction <add>, %6, %cst_6 [1] : vector<64x512xf32> to vector<64xf32>
    %9 = vector.shape_cast %8 : vector<64xf32> to vector<64x1xf32>
    %10 = arith.addf %7, %9 : vector<64x1xf32>
    %c0_7 = arith.constant 0 : index
    %c0_8 = arith.constant 0 : index
    %11 = vector.load %arg6[%c0_7, %c0_8] : memref<64x1xf32, #tpu.memory_space<vmem>>, vector<64x1xf32>
    tpu.vector_store %arg6[%c0_7, %c0_8], %10 {strides = array<i32>} : memref<64x1xf32, #tpu.memory_space<vmem>>, vector<64x1xf32>,
    %c0_9 = arith.constant 0 : index
    %c0_10 = arith.constant 0 : index
    %12 = vector.load %arg7[%c0_9, %c0_10] : memref<64x1xf32, #tpu.memory_space<vmem>>, vector<64x1xf32>
    %13 = arith.mulf %6, %6 : vector<64x512xf32>
    %cst_11 = arith.constant dense<0.000000e+00> : vector<64xf32>
    %14 = vector.multi_reduction <add>, %13, %cst_11 [1] : vector<64x512xf32> to vector<64xf32>
    %15 = vector.shape_cast %14 : vector<64xf32> to vector<64x1xf32>
    %16 = arith.addf %12, %15 : vector<64x1xf32>
    %c0_12 = arith.constant 0 : index
    %c0_13 = arith.constant 0 : index
    %17 = vector.load %arg7[%c0_12, %c0_13] : memref<64x1xf32, #tpu.memory_space<vmem>>, vector<64x1xf32>
    tpu.vector_store %arg7[%c0_12, %c0_13], %16 {strides = array<i32>} : memref<64x1xf32, #tpu.memory_space<vmem>>, vector<64x1xf32>,
    %18 = arith.truncf %6 : vector<64x512xf32> to vector<64x512xbf16>
    %c0_i32_14 = arith.constant 0 : i32
    %19 = arith.cmpi eq, %arg0, %c0_i32_14 : i32
    %20 = arith.extui %19 : i1 to i32
    %c0_i32_15 = arith.constant 0 : i32
    %21 = arith.cmpi ne, %20, %c0_i32_15 : i32
    scf.if %21 {
      %c0_19 = arith.constant 0 : index
      %c0_20 = arith.constant 0 : index
      %28 = vector.load %arg5[%c0_19, %c0_20] : memref<64x1024xbf16, #tpu.memory_space<vmem>>, vector<64x512xbf16>
      tpu.vector_store %arg5[%c0_19, %c0_20], %18 {strides = array<i32>} : memref<64x1024xbf16, #tpu.memory_space<vmem>>, vector<64x512xbf16>,
    } else {
    }
    %c1_i32 = arith.constant 1 : i32
    %22 = arith.cmpi eq, %arg0, %c1_i32 : i32
    %23 = arith.extui %22 : i1 to i32
    %c0_i32_16 = arith.constant 0 : i32
    %24 = arith.cmpi ne, %23, %c0_i32_16 : i32
    scf.if %24 {
      %c0_19 = arith.constant 0 : index
      %c512 = arith.constant 512 : index
      %28 = vector.load %arg5[%c0_19, %c512] : memref<64x1024xbf16, #tpu.memory_space<vmem>>, vector<64x512xbf16>
      tpu.vector_store %arg5[%c0_19, %c512], %18 {strides = array<i32>} : memref<64x1024xbf16, #tpu.memory_space<vmem>>, vector<64x512xbf16>,
    } else {
    }
    %c1_i32_17 = arith.constant 1 : i32
    %25 = arith.cmpi eq, %arg0, %c1_i32_17 : i32
    %26 = arith.extui %25 : i1 to i32
    %c0_i32_18 = arith.constant 0 : i32
    %27 = arith.cmpi ne, %26, %c0_i32_18 : i32
    scf.if %27 {
      %c0_19 = arith.constant 0 : index
      %c0_20 = arith.constant 0 : index
      %28 = vector.load %arg3[%c0_19, %c0_20] : memref<64x8xf32, #tpu.memory_space<vmem>>, vector<64x1xf32>
      %c0_21 = arith.constant 0 : index
      %c1 = arith.constant 1 : index
      %29 = vector.load %arg3[%c0_21, %c1] : memref<64x8xf32, #tpu.memory_space<vmem>>, vector<64x1xf32>
      %c0_22 = arith.constant 0 : index
      %c2 = arith.constant 2 : index
      %30 = vector.load %arg3[%c0_22, %c2] : memref<64x8xf32, #tpu.memory_space<vmem>>, vector<32x1xf32>
      %c0_23 = arith.constant 0 : index
      %c3 = arith.constant 3 : index
      %31 = vector.load %arg3[%c0_23, %c3] : memref<64x8xf32, #tpu.memory_space<vmem>>, vector<32x1xf32>
      %c0_24 = arith.constant 0 : index
      %c4 = arith.constant 4 : index
      %32 = vector.load %arg3[%c0_24, %c4] : memref<64x8xf32, #tpu.memory_space<vmem>>, vector<16x1xf32>
      %c0_25 = arith.constant 0 : index
      %c5 = arith.constant 5 : index
      %33 = vector.load %arg3[%c0_25, %c5] : memref<64x8xf32, #tpu.memory_space<vmem>>, vector<16x1xf32>
      %c0_26 = arith.constant 0 : index
      %c6 = arith.constant 6 : index
      %34 = vector.load %arg3[%c0_26, %c6] : memref<64x8xf32, #tpu.memory_space<vmem>>, vector<4x1xf32>
      %c0_27 = arith.constant 0 : index
      %c0_28 = arith.constant 0 : index
      %35 = vector.load %arg6[%c0_27, %c0_28] : memref<64x1xf32, #tpu.memory_space<vmem>>, vector<64x1xf32>
      %c0_29 = arith.constant 0 : index
      %c0_30 = arith.constant 0 : index
      %36 = vector.load %arg7[%c0_29, %c0_30] : memref<64x1xf32, #tpu.memory_space<vmem>>, vector<64x1xf32>
      %cst_31 = arith.constant 9.765625E-4 : f32
      %37 = vector.broadcast %cst_31 : f32 to vector<64x1xf32>
      %38 = arith.mulf %35, %37 : vector<64x1xf32>
      %cst_32 = arith.constant 9.765625E-4 : f32
      %39 = vector.broadcast %cst_32 : f32 to vector<64x1xf32>
      %40 = arith.mulf %36, %39 : vector<64x1xf32>
      %41 = arith.mulf %38, %38 : vector<64x1xf32>
      %42 = arith.subf %40, %41 : vector<64x1xf32>
      %cst_33 = arith.constant 0.000000e+00 : f32
      %43 = vector.broadcast %cst_33 : f32 to vector<64x1xf32>
      %44 = arith.maximumf %42, %43 : vector<64x1xf32>
      %cst_34 = arith.constant 9.99999974E-6 : f32
      %45 = vector.broadcast %cst_34 : f32 to vector<64x1xf32>
      %46 = arith.addf %44, %45 : vector<64x1xf32>
      %47 = math.rsqrt %46 : vector<64x1xf32>
      %48 = arith.mulf %28, %47 : vector<64x1xf32>
      %49 = arith.mulf %38, %48 : vector<64x1xf32>
      %50 = arith.subf %29, %49 : vector<64x1xf32>
      %c0_35 = arith.constant 0 : index
      %c0_36 = arith.constant 0 : index
      %51 = vector.load %arg5[%c0_35, %c0_36] : memref<64x1024xbf16, #tpu.memory_space<vmem>>, vector<64x1024xbf16>
      %52 = arith.extf %51 : vector<64x1024xbf16> to vector<64x1024xf32>
      %53 = vector.broadcast %48 : vector<64x1xf32> to vector<64x1024xf32>
      %54 = arith.mulf %52, %53 : vector<64x1024xf32>
      %55 = vector.broadcast %50 : vector<64x1xf32> to vector<64x1024xf32>
      %56 = arith.addf %54, %55 : vector<64x1024xf32>
      %cst_37 = arith.constant 0.000000e+00 : f32
      %57 = vector.broadcast %cst_37 : f32 to vector<64x1024xf32>
      %58 = arith.maximumf %56, %57 : vector<64x1024xf32>
      %59 = arith.truncf %58 : vector<64x1024xf32> to vector<64x1024xbf16>
      %c64 = arith.constant 64 : index
      %c0_38 = arith.constant 0 : index
      %60 = vector.load %arg2[%c64, %c0_38] : memref<116x64xbf16, #tpu.memory_space<vmem>>, vector<32x64xbf16>
      %cst_39 = arith.constant dense<0.000000e+00> : vector<32x1024xf32>
      %61 = tpu.matmul %60, %59, %cst_39 {dimension_numbers = #tpu.dot_dimension_numbers<[1], [0], [0], [1], [0, 0, 1, 1], [], []>} : vector<32x64xbf16>, vector<64x1024xbf16>, vector<32x1024xf32> -> vector<32x1024xf32>
      %cst_40 = arith.constant dense<0.000000e+00> : vector<32xf32>
      %62 = vector.multi_reduction <add>, %61, %cst_40 [1] : vector<32x1024xf32> to vector<32xf32>
      %63 = vector.shape_cast %62 : vector<32xf32> to vector<32x1xf32>
      %64 = arith.mulf %61, %61 : vector<32x1024xf32>
      %cst_41 = arith.constant dense<0.000000e+00> : vector<32xf32>
      %65 = vector.multi_reduction <add>, %64, %cst_41 [1] : vector<32x1024xf32> to vector<32xf32>
      %66 = vector.shape_cast %65 : vector<32xf32> to vector<32x1xf32>
      %cst_42 = arith.constant 9.765625E-4 : f32
      %67 = vector.broadcast %cst_42 : f32 to vector<32x1xf32>
      %68 = arith.mulf %63, %67 : vector<32x1xf32>
      %cst_43 = arith.constant 9.765625E-4 : f32
      %69 = vector.broadcast %cst_43 : f32 to vector<32x1xf32>
      %70 = arith.mulf %66, %69 : vector<32x1xf32>
      %71 = arith.mulf %68, %68 : vector<32x1xf32>
      %72 = arith.subf %70, %71 : vector<32x1xf32>
      %cst_44 = arith.constant 0.000000e+00 : f32
      %73 = vector.broadcast %cst_44 : f32 to vector<32x1xf32>
      %74 = arith.maximumf %72, %73 : vector<32x1xf32>
      %cst_45 = arith.constant 9.99999974E-6 : f32
      %75 = vector.broadcast %cst_45 : f32 to vector<32x1xf32>
      %76 = arith.addf %74, %75 : vector<32x1xf32>
      %77 = math.rsqrt %76 : vector<32x1xf32>
      %78 = arith.mulf %30, %77 : vector<32x1xf32>
      %79 = arith.mulf %68, %78 : vector<32x1xf32>
      %80 = arith.subf %31, %79 : vector<32x1xf32>
      %81 = vector.broadcast %78 : vector<32x1xf32> to vector<32x1024xf32>
      %82 = arith.mulf %61, %81 : vector<32x1024xf32>
      %83 = vector.broadcast %80 : vector<32x1xf32> to vector<32x1024xf32>
      %84 = arith.addf %82, %83 : vector<32x1024xf32>
      %cst_46 = arith.constant 0.000000e+00 : f32
      %85 = vector.broadcast %cst_46 : f32 to vector<32x1024xf32>
      %86 = arith.maximumf %84, %85 : vector<32x1024xf32>
      %87 = arith.truncf %86 : vector<32x1024xf32> to vector<32x1024xbf16>
      %c96 = arith.constant 96 : index
      %c0_47 = arith.constant 0 : index
      %88 = vector.load %arg2[%c96, %c0_47] : memref<116x64xbf16, #tpu.memory_space<vmem>>, vector<16x32xbf16>
      %cst_48 = arith.constant dense<0.000000e+00> : vector<16x1024xf32>
      %89 = tpu.matmul %88, %87, %cst_48 {dimension_numbers = #tpu.dot_dimension_numbers<[1], [0], [0], [1], [0, 0, 1, 1], [], []>} : vector<16x32xbf16>, vector<32x1024xbf16>, vector<16x1024xf32> -> vector<16x1024xf32>
      %cst_49 = arith.constant dense<0.000000e+00> : vector<16xf32>
      %90 = vector.multi_reduction <add>, %89, %cst_49 [1] : vector<16x1024xf32> to vector<16xf32>
      %91 = vector.shape_cast %90 : vector<16xf32> to vector<16x1xf32>
      %92 = arith.mulf %89, %89 : vector<16x1024xf32>
      %cst_50 = arith.constant dense<0.000000e+00> : vector<16xf32>
      %93 = vector.multi_reduction <add>, %92, %cst_50 [1] : vector<16x1024xf32> to vector<16xf32>
      %94 = vector.shape_cast %93 : vector<16xf32> to vector<16x1xf32>
      %cst_51 = arith.constant 9.765625E-4 : f32
      %95 = vector.broadcast %cst_51 : f32 to vector<16x1xf32>
      %96 = arith.mulf %91, %95 : vector<16x1xf32>
      %cst_52 = arith.constant 9.765625E-4 : f32
      %97 = vector.broadcast %cst_52 : f32 to vector<16x1xf32>
      %98 = arith.mulf %94, %97 : vector<16x1xf32>
      %99 = arith.mulf %96, %96 : vector<16x1xf32>
      %100 = arith.subf %98, %99 : vector<16x1xf32>
      %cst_53 = arith.constant 0.000000e+00 : f32
      %101 = vector.broadcast %cst_53 : f32 to vector<16x1xf32>
      %102 = arith.maximumf %100, %101 : vector<16x1xf32>
      %cst_54 = arith.constant 9.99999974E-6 : f32
      %103 = vector.broadcast %cst_54 : f32 to vector<16x1xf32>
      %104 = arith.addf %102, %103 : vector<16x1xf32>
      %105 = math.rsqrt %104 : vector<16x1xf32>
      %106 = arith.mulf %32, %105 : vector<16x1xf32>
      %107 = arith.mulf %96, %106 : vector<16x1xf32>
      %108 = arith.subf %33, %107 : vector<16x1xf32>
      %109 = vector.broadcast %106 : vector<16x1xf32> to vector<16x1024xf32>
      %110 = arith.mulf %89, %109 : vector<16x1024xf32>
      %111 = vector.broadcast %108 : vector<16x1xf32> to vector<16x1024xf32>
      %112 = arith.addf %110, %111 : vector<16x1024xf32>
      %cst_55 = arith.constant 0.000000e+00 : f32
      %113 = vector.broadcast %cst_55 : f32 to vector<16x1024xf32>
      %114 = arith.maximumf %112, %113 : vector<16x1024xf32>
      %115 = arith.truncf %114 : vector<16x1024xf32> to vector<16x1024xbf16>
      %c112 = arith.constant 112 : index
      %c0_56 = arith.constant 0 : index
      %116 = vector.load %arg2[%c112, %c0_56] : memref<116x64xbf16, #tpu.memory_space<vmem>>, vector<4x16xbf16>
      %cst_57 = arith.constant dense<0.000000e+00> : vector<4x1024xf32>
      %117 = tpu.matmul %116, %115, %cst_57 {dimension_numbers = #tpu.dot_dimension_numbers<[1], [0], [0], [1], [0, 0, 1, 1], [], []>} : vector<4x16xbf16>, vector<16x1024xbf16>, vector<4x1024xf32> -> vector<4x1024xf32>
      %118 = vector.broadcast %34 : vector<4x1xf32> to vector<4x1024xf32>
      %119 = arith.addf %117, %118 : vector<4x1024xf32>
      %cst_58 = arith.constant 0.000000e+00 : f32
      %120 = vector.broadcast %cst_58 : f32 to vector<4x1024xf32>
      %121 = arith.maximumf %119, %120 : vector<4x1024xf32>
      %c0_59 = arith.constant 0 : index
      %c0_60 = arith.constant 0 : index
      %122 = vector.load %arg4[%c0_59, %c0_60] : memref<4x1024xf32, #tpu.memory_space<vmem>>, vector<4x1024xf32>
      tpu.vector_store %arg4[%c0_59, %c0_60], %121 {strides = array<i32>} : memref<4x1024xf32, #tpu.memory_space<vmem>>, vector<4x1024xf32>,
    } else {
    }
    return
  }
  func.func @transform_0(%arg0: i32) -> (i32, i32) {
    %c0_i32 = arith.constant 0 : i32
    %c0_i32_0 = arith.constant 0 : i32
    return %arg0, %c0_i32 : i32, i32
  }
  func.func @transform_1(%arg0: i32) -> (i32, i32) {
    %c0_i32 = arith.constant 0 : i32
    %c0_i32_0 = arith.constant 0 : i32
    %c0_i32_1 = arith.constant 0 : i32
    return %c0_i32, %c0_i32_0 : i32, i32
  }
  func.func @transform_2(%arg0: i32) -> (i32, i32) {
    %c0_i32 = arith.constant 0 : i32
    %c0_i32_0 = arith.constant 0 : i32
    %c0_i32_1 = arith.constant 0 : i32
    return %c0_i32, %c0_i32_0 : i32, i32
  }
  func.func @transform_3(%arg0: i32) -> (i32, i32) {
    %c0_i32 = arith.constant 0 : i32
    %c0_i32_0 = arith.constant 0 : i32
    %c0_i32_1 = arith.constant 0 : i32
    return %c0_i32, %c0_i32_0 : i32, i32
  }
}

</mosaic_0001>

<llo_original>
// kernel: congestion_forward.1
$region0: #{congestion_forward.1}
  #allocation0 [shape = 'u32[]', space=smem, size = 0x4, offset = 0x4, fixed_abs, tag = 'smem constant byte address 0x4 - core index']
  #allocation1 [shape = 'u32[144,128]{1,0:T(1,128)}', space=vmem, size = 0x12000, scoped, tag = 'internal scratch']
  #allocation2 [shape = 'bf16[64,1024]{1,0:T(16,128)(2,1)}', space=vmem, size = 0x20000, scoped, tag = 'scratch operand']
  #allocation3 [shape = 'f32[64,1]{1,0:T(8,128)}', space=vmem, size = 0x8000, scoped, tag = 'scratch operand']
  #allocation4 [shape = 'f32[64,1]{1,0:T(8,128)}', space=vmem, size = 0x8000, scoped, tag = 'scratch operand']
  %s0 = inlined_call_operand.vmem [shape: f32[1024,12], index: 0, kind: input, shape index: {}]
  %s1 = inlined_call_operand.vmem [shape: bf16[116,64], index: 1, kind: input, shape index: {}]
  %s2 = inlined_call_operand.vmem [shape: f32[64,8], index: 2, kind: input, shape index: {}]
  %s3 = inlined_call_operand.hbm [shape: f32[4,1024], index: 3, kind: output, shape index: {}]
  %s4 = sld [smem:[#allocation0]]
  $region57: #{congestion_forward.1} parent=0
    _
  %s6 = ssub.s32 1, %s4
  %s7 = scalar_select 0, %s6, %s4
  $region1: #{congestion_forward.1} parent=0
    #allocation5 [shape = 'u8[16384]{0}', space=vmem, size = 0x4000, scoped, tag = 'output window, operand 0, single buffered']
    #allocation6 [shape = 's32[2]{0}', space=sflag, size = 0x8, scoped, tag = 'scoped memory for congestion_forward.1']
    %8 = vsyncpa [#allocation6], 0
    loop: start=0, step=1, limit=4
    $region2: #{congestion_forward.1} parent=1 // loop_pre_header
      _
    $region3: #{congestion_forward.1} parent=1 // loop_header
      %s10 = sphi 0, %s14
      %p11 = scmp.ge.s32.totalorder %s10, 4
      %s20 = sphi 0, %s22
      %s23 = sphi 0, %s20
      %s24 = sphi 0, %s23
      %s40 = sphi 0, %s24
      %s44 = sphi 0, %s44
      %s46 = sphi 0, %s44
      %s47 = sphi 0, %s46
      %s61 = sphi 0, %s47
      %s65 = sphi 0, %s65
      %s67 = sphi 0, %s65
      %s68 = sphi 0, %s67
      %s82 = sphi 0, %s68
      %s86 = sphi 0, %s86
      %s88 = sphi 0, %s86
      %s89 = sphi 0, %s88
      %s103 = sphi 0, %s89
    $region4: #{congestion_forward.1} parent=1 // loop_header_branch
      %13 = sbr.rel (%p11) target = $region8
    $region5: #{congestion_forward.1} parent=1 // loop_body
      %s15 = ssub.s32 %s10, 1
      %s16 = ssub.s32 %s10, 2
      %s17 = sadd.s32 %s10, 1
      %s18 = ssub.s32 %s10, %s17
      %p19 = scmp.eq.s32.totalorder %s18, 0
      %s21 = sadd.s32 %s20, 1
      %s22 = scalar_select %p19, %s20, %s21
      %p25 = pneg %p19
      %p26 = scmp.eq.s32.totalorder %s10, 1
      %p27 = por %p25, %p26
      %p28 = scmp.ne.s32.totalorder %s20, %s23
      %p29 = scmp.eq.s32.totalorder %s10, 0
      %p30 = por %p28, %p29
      %p31 = scmp.ne.s32.totalorder %s20, %s23
      %p32 = scmp.eq.s32.totalorder %s15, 1
      %p33 = por %p31, %p32
      %p34 = scmp.ne.s32.totalorder %s23, %s24
      %p35 = scmp.eq.s32.totalorder %s15, 0
      %p36 = por %p34, %p35
      %p37 = scmp.ne.s32.totalorder %s23, %s24
      %p38 = scmp.eq.s32.totalorder %s16, 1
      %p39 = por %p37, %p38
      %p41 = scmp.ne.s32.totalorder %s24, %s40
      %p42 = scmp.eq.s32.totalorder %s16, 0
      %p43 = por %p41, %p42
      %s45 = sadd.s32 %s44, 1
      %p48 = scmp.eq.s32.totalorder %s10, 1
      %p49 = scmp.ne.s32.totalorder %s44, %s46
      %p50 = scmp.eq.s32.totalorder %s10, 0
      %p51 = por %p49, %p50
      %p52 = scmp.ne.s32.totalorder %s44, %s46
      %p53 = scmp.eq.s32.totalorder %s15, 1
      %p54 = por %p52, %p53
      %p55 = scmp.ne.s32.totalorder %s46, %s47
      %p56 = scmp.eq.s32.totalorder %s15, 0
      %p57 = por %p55, %p56
      %p58 = scmp.ne.s32.totalorder %s46, %s47
      %p59 = scmp.eq.s32.totalorder %s16, 1
      %p60 = por %p58, %p59
      %p62 = scmp.ne.s32.totalorder %s47, %s61
      %p63 = scmp.eq.s32.totalorder %s16, 0
      %p64 = por %p62, %p63
      %s66 = sadd.s32 %s65, 1
      %p69 = scmp.eq.s32.totalorder %s10, 1
      %p70 = scmp.ne.s32.totalorder %s65, %s67
      %p71 = scmp.eq.s32.totalorder %s10, 0
      %p72 = por %p70, %p71
      %p73 = scmp.ne.s32.totalorder %s65, %s67
      %p74 = scmp.eq.s32.totalorder %s15, 1
      %p75 = por %p73, %p74
      %p76 = scmp.ne.s32.totalorder %s67, %s68
      %p77 = scmp.eq.s32.totalorder %s15, 0
      %p78 = por %p76, %p77
      %p79 = scmp.ne.s32.totalorder %s67, %s68
      %p80 = scmp.eq.s32.totalorder %s16, 1
      %p81 = por %p79, %p80
      %p83 = scmp.ne.s32.totalorder %s68, %s82
      %p84 = scmp.eq.s32.totalorder %s16, 0
      %p85 = por %p83, %p84
      %s87 = sadd.s32 %s86, 1
      %p90 = scmp.eq.s32.totalorder %s10, 1
      %p91 = scmp.ne.s32.totalorder %s86, %s88
      %p92 = scmp.eq.s32.totalorder %s10, 0
      %p93 = por %p91, %p92
      %p94 = scmp.ne.s32.totalorder %s86, %s88
      %p95 = scmp.eq.s32.totalorder %s15, 1
      %p96 = por %p94, %p95
      %p97 = scmp.ne.s32.totalorder %s88, %s89
      %p98 = scmp.eq.s32.totalorder %s15, 0
      %p99 = por %p97, %p98
      %p100 = scmp.ne.s32.totalorder %s88, %s89
      %p101 = scmp.eq.s32.totalorder %s16, 1
      %p102 = por %p100, %p101
      %p104 = scmp.ne.s32.totalorder %s89, %s103
      %p105 = scmp.eq.s32.totalorder %s16, 0
      %p106 = por %p104, %p105
      %p107 = scmp.le.s32.totalorder 1, %s10
      %p108 = scmp.lt.s32.totalorder %s10, 3
      %p109 = pnand %p107, %p108
      %p110 = pneg %p109
      // Predicated region
      $region9: #{congestion_forward.1} parent=5 // pred_check
        _
      $region10: #{congestion_forward.1} parent=5 // pred_check_branch
        %112 = sbr.rel (%p109) target = $region12
      $region11: #{congestion_forward.1} parent=5 // pred_region
        %s113 = ssub.s32 %s10, 1
        // Predicated region
        $region13: #{congestion_forward.1} parent=11 // pred_check
          %p114 = pneg %p57
        $region14: #{congestion_forward.1} parent=11 // pred_check_branch
          %116 = sbr.rel (%p114) target = $region16
        $region15: #{congestion_forward.1} parent=11 // pred_region
          _
        $region16: #{congestion_forward.1} parent=11 // pred_fallthru
          _
        // Predicated region
        $region17: #{congestion_forward.1} parent=11 // pred_check
          %p117 = pneg %p78
        $region18: #{congestion_forward.1} parent=11 // pred_check_branch
          %119 = sbr.rel (%p117) target = $region20
        $region19: #{congestion_forward.1} parent=11 // pred_region
          _
        $region20: #{congestion_forward.1} parent=11 // pred_fallthru
          _
      $region12: #{congestion_forward.1} parent=5 // pred_fallthru
        _
      %p120 = scmp.lt.s32.totalorder %s10, 2
      // Predicated region
      $region21: #{congestion_forward.1} parent=5 // pred_check
        %p121 = pneg %p120
      $region22: #{congestion_forward.1} parent=5 // pred_check_branch
        %123 = sbr.rel (%p121) target = $region24
      $region23: #{congestion_forward.1} parent=5 // pred_region
        // Predicated region
        $region25: #{congestion_forward.1} parent=23 // pred_check
          %p124 = pneg %p30
        $region26: #{congestion_forward.1} parent=23 // pred_check_branch
          %126 = sbr.rel (%p124) target = $region28
        $region27: #{congestion_forward.1} parent=23 // pred_region
          %s127 = smul.u32 64, %s10
          %p128 = scmp.lt.s32.totalorder %s127, 127
          %s129 = scalar_select %p128, %s127, 127
          %s130 = smul.addr %s129, 8
          %s131 = scalar_lea.vmem %s0, %s130
          %s132 = smul.u32 64, %s10
        $region28: #{congestion_forward.1} parent=23 // pred_fallthru
          _
      $region24: #{congestion_forward.1} parent=5 // pred_fallthru
        _
      %p133 = scmp.le.s32.totalorder 1, %s10
      %p134 = scmp.lt.s32.totalorder %s10, 3
      %p135 = pnand %p133, %p134
      %p136 = pneg %p135
      // Predicated region
      $region29: #{congestion_forward.1} parent=5 // pred_check
        _
      $region30: #{congestion_forward.1} parent=5 // pred_check_branch
        %138 = sbr.rel (%p135) target = $region32
      $region31: #{congestion_forward.1} parent=5 // pred_region
        %s139 = ssub.s32 %s10, 1
        %s140 = smul.u32 64, %s15
        %p141 = scmp.lt.s32.totalorder %s140, 127
        %s142 = scalar_select %p141, %s140, 127
        %s143 = smul.addr %s142, 8
        %s144 = scalar_lea.vmem %s0, %s143
        %p145 = pneg %p36
        %p146 = pneg %p33
        %p147 = pneg %p57
        %p148 = pneg %p54
        %p149 = pneg %p78
        %p150 = pneg %p75
        %p151 = pneg %p99
        %p152 = pneg %p96
        %s153 = smul.u32 64, %s15
        %p154 = scmp.lt.s32.totalorder %s153, 127
        %s155 = scalar_select %p154, %s153, 127
        %s156 = smul.addr %s155, 8
        %s157 = scalar_lea.vmem %s0, %s156
        %s158 = smul.u32 64, %s15
        %p160 = scmp.eq.s32.totalorder %s15, 0
        // Predicated region
        $region33: #{congestion_forward.1} parent=31 // pred_check
          %p161 = pneg %p160
        $region34: #{congestion_forward.1} parent=31 // pred_check_branch
          %163 = sbr.rel (%p161) target = $region36
        $region35: #{congestion_forward.1} parent=31 // pred_region
          %vm164 = vcmask 7168
          %165 = vst.msk [vmem:[#allocation3] sm:$0xff] %vm164, 0.0
          %166 = vst.msk [vmem:[#allocation3 + $0x8] sm:$0xff] %vm164, 0.0
          %167 = vst.msk [vmem:[#allocation3 + $0x10] sm:$0xff] %vm164, 0.0
          %168 = vst.msk [vmem:[#allocation3 + $0x18] sm:$0xff] %vm164, 0.0
          %169 = vst.msk [vmem:[#allocation3 + $0x20] sm:$0xff] %vm164, 0.0
          %170 = vst.msk [vmem:[#allocation3 + $0x28] sm:$0xff] %vm164, 0.0
          %171 = vst.msk [vmem:[#allocation3 + $0x30] sm:$0xff] %vm164, 0.0
          %172 = vst.msk [vmem:[#allocation3 + $0x38] sm:$0xff] %vm164, 0.0
          %173 = vst.msk [vmem:[#allocation4] sm:$0xff] %vm164, 0.0
          %174 = vst.msk [vmem:[#allocation4 + $0x8] sm:$0xff] %vm164, 0.0
          %175 = vst.msk [vmem:[#allocation4 + $0x10] sm:$0xff] %vm164, 0.0
          %176 = vst.msk [vmem:[#allocation4 + $0x18] sm:$0xff] %vm164, 0.0
          %177 = vst.msk [vmem:[#allocation4 + $0x20] sm:$0xff] %vm164, 0.0
          %178 = vst.msk [vmem:[#allocation4 + $0x28] sm:$0xff] %vm164, 0.0
          %179 = vst.msk [vmem:[#allocation4 + $0x30] sm:$0xff] %vm164, 0.0
          %180 = vst.msk [vmem:[#allocation4 + $0x38] sm:$0xff] %vm164, 0.0
        $region36: #{congestion_forward.1} parent=31 // pred_fallthru
          _
        %v181 = vld [vmem:[%s1] sm:$0xf]
        %v182 = vld [vmem:[%s1 + $0x4] sm:$0xf]
        %v183 = vld [vmem:[%s1 + $0x8] sm:$0xf]
        %v184 = vld [vmem:[%s1 + $0xc] sm:$0xf]
        %v185 = vld [vmem:[%s1 + $0x10] sm:$0xf]
        %v186 = vld [vmem:[%s1 + $0x14] sm:$0xf]
        %v187 = vld [vmem:[%s1 + $0x18] sm:$0xf]
        %v188 = vld [vmem:[%s1 + $0x1c] sm:$0xf]
        %v189 = vld [vmem:[%s157] sm:$0xff]
        %v190 = vld [vmem:[%s157 + $0x8] sm:$0xff]
        %v191 = vld [vmem:[%s157 + $0x10] sm:$0xff]
        %v192 = vld [vmem:[%s157 + $0x18] sm:$0xff]
        %v193 = vld [vmem:[%s157 + $0x20] sm:$0xff]
        %v194 = vld [vmem:[%s157 + $0x28] sm:$0xff]
        %v195 = vld [vmem:[%s157 + $0x30] sm:$0xff]
        %v196 = vld [vmem:[%s157 + $0x38] sm:$0xff]
        %v197 = vld [vmem:[%s157 + $0x40] sm:$0xff]
        %v198 = vld [vmem:[%s157 + $0x48] sm:$0xff]
        %v199 = vld [vmem:[%s157 + $0x50] sm:$0xff]
        %v200 = vld [vmem:[%s157 + $0x58] sm:$0xff]
        %v201 = vld [vmem:[%s157 + $0x60] sm:$0xff]
        %v202 = vld [vmem:[%s157 + $0x68] sm:$0xff]
        %v203 = vld [vmem:[%s157 + $0x70] sm:$0xff]
        %v204 = vld [vmem:[%s157 + $0x78] sm:$0xff]
        %v205 = vld [vmem:[%s157 + $0x80] sm:$0xff]
        %v206 = vld [vmem:[%s157 + $0x88] sm:$0xff]
        %v207 = vld [vmem:[%s157 + $0x90] sm:$0xff]
        %v208 = vld [vmem:[%s157 + $0x98] sm:$0xff]
        %v209 = vld [vmem:[%s157 + $0xa0] sm:$0xff]
        %v210 = vld [vmem:[%s157 + $0xa8] sm:$0xff]
        %v211 = vld [vmem:[%s157 + $0xb0] sm:$0xff]
        %v212 = vld [vmem:[%s157 + $0xb8] sm:$0xff]
        %v213 = vld [vmem:[%s157 + $0xc0] sm:$0xff]
        %v214 = vld [vmem:[%s157 + $0xc8] sm:$0xff]
        %v215 = vld [vmem:[%s157 + $0xd0] sm:$0xff]
        %v216 = vld [vmem:[%s157 + $0xd8] sm:$0xff]
        %v217 = vld [vmem:[%s157 + $0xe0] sm:$0xff]
        %v218 = vld [vmem:[%s157 + $0xe8] sm:$0xff]
        %v219 = vld [vmem:[%s157 + $0xf0] sm:$0xff]
        %v220 = vld [vmem:[%s157 + $0xf8] sm:$0xff]
        %v221 = vld [vmem:[%s157 + $0x100] sm:$0xff]
        %v222 = vld [vmem:[%s157 + $0x108] sm:$0xff]
        %v223 = vld [vmem:[%s157 + $0x110] sm:$0xff]
        %v224 = vld [vmem:[%s157 + $0x118] sm:$0xff]
        %v225 = vld [vmem:[%s157 + $0x120] sm:$0xff]
        %v226 = vld [vmem:[%s157 + $0x128] sm:$0xff]
        %v227 = vld [vmem:[%s157 + $0x130] sm:$0xff]
        %v228 = vld [vmem:[%s157 + $0x138] sm:$0xff]
        %v229 = vld [vmem:[%s157 + $0x140] sm:$0xff]
        %v230 = vld [vmem:[%s157 + $0x148] sm:$0xff]
        %v231 = vld [vmem:[%s157 + $0x150] sm:$0xff]
        %v232 = vld [vmem:[%s157 + $0x158] sm:$0xff]
        %v233 = vld [vmem:[%s157 + $0x160] sm:$0xff]
        %v234 = vld [vmem:[%s157 + $0x168] sm:$0xff]
        %v235 = vld [vmem:[%s157 + $0x170] sm:$0xff]
        %v236 = vld [vmem:[%s157 + $0x178] sm:$0xff]
        %v237 = vld [vmem:[%s157 + $0x180] sm:$0xff]
        %v238 = vld [vmem:[%s157 + $0x188] sm:$0xff]
        %v239 = vld [vmem:[%s157 + $0x190] sm:$0xff]
        %v240 = vld [vmem:[%s157 + $0x198] sm:$0xff]
        %v241 = vld [vmem:[%s157 + $0x1a0] sm:$0xff]
        %v242 = vld [vmem:[%s157 + $0x1a8] sm:$0xff]
        %v243 = vld [vmem:[%s157 + $0x1b0] sm:$0xff]
        %v244 = vld [vmem:[%s157 + $0x1b8] sm:$0xff]
        %v245 = vld [vmem:[%s157 + $0x1c0] sm:$0xff]
        %v246 = vld [vmem:[%s157 + $0x1c8] sm:$0xff]
        %v247 = vld [vmem:[%s157 + $0x1d0] sm:$0xff]
        %v248 = vld [vmem:[%s157 + $0x1d8] sm:$0xff]
        %v249 = vld [vmem:[%s157 + $0x1e0] sm:$0xff]
        %v250 = vld [vmem:[%s157 + $0x1e8] sm:$0xff]
        %v251 = vld [vmem:[%s157 + $0x1f0] sm:$0xff]
        %v252 = vld [vmem:[%s157 + $0x1f8] sm:$0xff]
        %v253 = vpack.c.bf16 %v190, %v189
        %v254 = vpack.c.bf16 %v192, %v191
        %v255 = vpack.c.bf16 %v194, %v193
        %v256 = vpack.c.bf16 %v196, %v195
        %v257 = vpack.c.bf16 %v198, %v197
        %v258 = vpack.c.bf16 %v200, %v199
        %v259 = vpack.c.bf16 %v202, %v201
        %v260 = vpack.c.bf16 %v204, %v203
        %v261 = vpack.c.bf16 %v206, %v205
        %v262 = vpack.c.bf16 %v208, %v207
        %v263 = vpack.c.bf16 %v210, %v209
        %v264 = vpack.c.bf16 %v212, %v211
        %v265 = vpack.c.bf16 %v214, %v213
        %v266 = vpack.c.bf16 %v216, %v215
        %v267 = vpack.c.bf16 %v218, %v217
        %v268 = vpack.c.bf16 %v220, %v219
        %v269 = vpack.c.bf16 %v222, %v221
        %v270 = vpack.c.bf16 %v224, %v223
        %v271 = vpack.c.bf16 %v226, %v225
        %v272 = vpack.c.bf16 %v228, %v227
        %v273 = vpack.c.bf16 %v230, %v229
        %v274 = vpack.c.bf16 %v232, %v231
        %v275 = vpack.c.bf16 %v234, %v233
        %v276 = vpack.c.bf16 %v236, %v235
        %v277 = vpack.c.bf16 %v238, %v237
        %v278 = vpack.c.bf16 %v240, %v239
        %v279 = vpack.c.bf16 %v242, %v241
        %v280 = vpack.c.bf16 %v244, %v243
        %v281 = vpack.c.bf16 %v246, %v245
        %v282 = vpack.c.bf16 %v248, %v247
        %v283 = vpack.c.bf16 %v250, %v249
        %v284 = vpack.c.bf16 %v252, %v251
        %v293 = vunpack.c.l.b16 %v181
        %v294 = vunpack.c.l.b16 %v182
        %v295 = vunpack.c.l.b16 %v183
        %v296 = vunpack.c.l.b16 %v184
        %v297 = vunpack.c.l.b16 %v185
        %v298 = vunpack.c.l.b16 %v186
        %v299 = vunpack.c.l.b16 %v187
        %v300 = vunpack.c.l.b16 %v188
        %v301 = vpack.c.b16 %v294, %v293
        %v302 = vpack.c.b16 %v296, %v295
        %v303 = vpack.c.b16 %v298, %v297
        %v304 = vpack.c.b16 %v300, %v299
        %vm305 = vcmask 97280
        %v307 = vsel %vm305, %v301, 0
        %v310 = vsel %vm305, %v302, 0
        %v313 = vsel %vm305, %v303, 0
        %v316 = vsel %vm305, %v304, 0
        %v319 = vsel %vm305, %v253, 0
        %v322 = vsel %vm305, %v254, 0
        %v325 = vsel %vm305, %v255, 0
        %v328 = vsel %vm305, %v256, 0
        %v331 = vsel %vm305, %v257, 0
        %v334 = vsel %vm305, %v258, 0
        %v337 = vsel %vm305, %v259, 0
        %v340 = vsel %vm305, %v260, 0
        %v343 = vsel %vm305, %v261, 0
        %v346 = vsel %vm305, %v262, 0
        %v349 = vsel %vm305, %v263, 0
        %v352 = vsel %vm305, %v264, 0
        %v355 = vsel %vm305, %v265, 0
        %v358 = vsel %vm305, %v266, 0
        %v361 = vsel %vm305, %v267, 0
        %v364 = vsel %vm305, %v268, 0
        %v367 = vsel %vm305, %v269, 0
        %v370 = vsel %vm305, %v270, 0
        %v373 = vsel %vm305, %v271, 0
        %v376 = vsel %vm305, %v272, 0
        %v379 = vsel %vm305, %v273, 0
        %v382 = vsel %vm305, %v274, 0
        %v385 = vsel %vm305, %v275, 0
        %v388 = vsel %vm305, %v276, 0
        %v391 = vsel %vm305, %v277, 0
        %v394 = vsel %vm305, %v278, 0
        %v397 = vsel %vm305, %v279, 0
        %v400 = vsel %vm305, %v280, 0
        %v403 = vsel %vm305, %v281, 0
        %v406 = vsel %vm305, %v282, 0
        %v409 = vsel %vm305, %v283, 0
        %v412 = vsel %vm305, %v284, 0
        %414 = vmatprep.subr.bf16.mxu0 0
        %415 = vmatpush1.bf16.xpose.msra.mxu0 %v319
        %416 = vmatprep.subr.bf16.mxu0 0
        %417 = vmatpush1.bf16.xpose.msra.mxu0 %v322
        %418 = vmatprep.subr.bf16.mxu0 0
        %419 = vmatpush1.bf16.xpose.msra.mxu0 %v325
        %420 = vmatprep.subr.bf16.mxu0 0
        %421 = vmatpush1.bf16.xpose.msra.mxu0 %v328
        %422 = vmatprep.subr.bf16.mxu0 0
        %423 = vmatpush1.bf16.xpose.msra.mxu0 %v331
        %424 = vmatprep.subr.bf16.mxu0 0
        %425 = vmatpush1.bf16.xpose.msra.mxu0 %v334
        %426 = vmatprep.subr.bf16.mxu0 0
        %427 = vmatpush1.bf16.xpose.msra.mxu0 %v337
        %428 = vmatprep.subr.bf16.mxu0 0
        %429 = vmatpush1.bf16.xpose.msra.mxu0 %v340
        %430 = vmatprep.subr.bf16.mxu0 0
        %431 = vmatpush1.bf16.xpose.msra.mxu0 %v343
        %432 = vmatprep.subr.bf16.mxu0 0
        %433 = vmatpush1.bf16.xpose.msra.mxu0 %v346
        %434 = vmatprep.subr.bf16.mxu0 0
        %435 = vmatpush1.bf16.xpose.msra.mxu0 %v349
        %436 = vmatprep.subr.bf16.mxu0 0
        %437 = vmatpush1.bf16.xpose.msra.mxu0 %v352
        %438 = vmatprep.subr.bf16.mxu0 0
        %439 = vmatpush1.bf16.xpose.msra.mxu0 %v355
        %440 = vmatprep.subr.bf16.mxu0 0
        %441 = vmatpush1.bf16.xpose.msra.mxu0 %v358
        %442 = vmatprep.subr.bf16.mxu0 0
        %443 = vmatpush1.bf16.xpose.msra.mxu0 %v361
        %444 = vmatprep.subr.bf16.mxu0 0
        %445 = vmatpush1.bf16.xpose.msra.mxu0 %v364
        %446 = vmatprep.mubr.bf16.mxu0 0
        %447 = vmatmul.mubr.bf16.gmra.mrb[0].mxu0 %v307
        %v448 = vpop.f32.mrb[0].mxu0
        %v449 = vadd.f32 0.0, %v448
        %v450 = vpop.f32.mrb[0].mxu0
        %v451 = vadd.f32 0.0, %v450
        %v452 = vpop.f32.mrb[0].mxu0
        %v453 = vadd.f32 0.0, %v452
        %v454 = vpop.f32.mrb[0].mxu0
        %v455 = vadd.f32 0.0, %v454
        %456 = vmatprep.mubr.bf16.mxu0 0
        %457 = vmatmul.mubr.bf16.gmra.mrb[0].mxu0 %v310
        %v458 = vpop.f32.mrb[0].mxu0
        %v459 = vadd.f32 0.0, %v458
        %v460 = vpop.f32.mrb[0].mxu0
        %v461 = vadd.f32 0.0, %v460
        %v462 = vpop.f32.mrb[0].mxu0
        %v463 = vadd.f32 0.0, %v462
        %v464 = vpop.f32.mrb[0].mxu0
        %v465 = vadd.f32 0.0, %v464
        %466 = vmatprep.mubr.bf16.mxu0 0
        %467 = vmatmul.mubr.bf16.gmra.mrb[0].mxu0 %v313
        %v468 = vpop.f32.mrb[0].mxu0
        %v469 = vadd.f32 0.0, %v468
        %v470 = vpop.f32.mrb[0].mxu0
        %v471 = vadd.f32 0.0, %v470
        %v472 = vpop.f32.mrb[0].mxu0
        %v473 = vadd.f32 0.0, %v472
        %v474 = vpop.f32.mrb[0].mxu0
        %v475 = vadd.f32 0.0, %v474
        %476 = vmatprep.mubr.bf16.mxu0 0
        %477 = vmatmul.mubr.bf16.gmra.mrb[0].mxu0 %v316
        %v478 = vpop.f32.mrb[0].mxu0
        %v479 = vadd.f32 0.0, %v478
        %v480 = vpop.f32.mrb[0].mxu0
        %v481 = vadd.f32 0.0, %v480
        %v482 = vpop.f32.mrb[0].mxu0
        %v483 = vadd.f32 0.0, %v482
        %v484 = vpop.f32.mrb[0].mxu0
        %v485 = vadd.f32 0.0, %v484
        %486 = vdwg.mxu0
        %487 = vmatprep.subr.bf16.mxu0 0
        %488 = vmatpush1.bf16.xpose.msra.mxu0 %v367
        %489 = vmatprep.subr.bf16.mxu0 0
        %490 = vmatpush1.bf16.xpose.msra.mxu0 %v370
        %491 = vmatprep.subr.bf16.mxu0 0
        %492 = vmatpush1.bf16.xpose.msra.mxu0 %v373
        %493 = vmatprep.subr.bf16.mxu0 0
        %494 = vmatpush1.bf16.xpose.msra.mxu0 %v376
        %495 = vmatprep.subr.bf16.mxu0 0
        %496 = vmatpush1.bf16.xpose.msra.mxu0 %v379
        %497 = vmatprep.subr.bf16.mxu0 0
        %498 = vmatpush1.bf16.xpose.msra.mxu0 %v382
        %499 = vmatprep.subr.bf16.mxu0 0
        %500 = vmatpush1.bf16.xpose.msra.mxu0 %v385
        %501 = vmatprep.subr.bf16.mxu0 0
        %502 = vmatpush1.bf16.xpose.msra.mxu0 %v388
        %503 = vmatprep.subr.bf16.mxu0 0
        %504 = vmatpush1.bf16.xpose.msra.mxu0 %v391
        %505 = vmatprep.subr.bf16.mxu0 0
        %506 = vmatpush1.bf16.xpose.msra.mxu0 %v394
        %507 = vmatprep.subr.bf16.mxu0 0
        %508 = vmatpush1.bf16.xpose.msra.mxu0 %v397
        %509 = vmatprep.subr.bf16.mxu0 0
        %510 = vmatpush1.bf16.xpose.msra.mxu0 %v400
        %511 = vmatprep.subr.bf16.mxu0 0
        %512 = vmatpush1.bf16.xpose.msra.mxu0 %v403
        %513 = vmatprep.subr.bf16.mxu0 0
        %514 = vmatpush1.bf16.xpose.msra.mxu0 %v406
        %515 = vmatprep.subr.bf16.mxu0 0
        %516 = vmatpush1.bf16.xpose.msra.mxu0 %v409
        %517 = vmatprep.subr.bf16.mxu0 0
        %518 = vmatpush1.bf16.xpose.msra.mxu0 %v412
        %519 = vmatprep.mubr.bf16.mxu0 0
        %520 = vmatmul.mubr.bf16.gmra.mrb[0].mxu0 %v307
        %v521 = vpop.f32.mrb[0].mxu0
        %v522 = vadd.f32 0.0, %v521
        %v523 = vpop.f32.mrb[0].mxu0
        %v524 = vadd.f32 0.0, %v523
        %v525 = vpop.f32.mrb[0].mxu0
        %v526 = vadd.f32 0.0, %v525
        %v527 = vpop.f32.mrb[0].mxu0
        %v528 = vadd.f32 0.0, %v527
        %529 = vmatprep.mubr.bf16.mxu0 0
        %530 = vmatmul.mubr.bf16.gmra.mrb[0].mxu0 %v310
        %v531 = vpop.f32.mrb[0].mxu0
        %v532 = vadd.f32 0.0, %v531
        %v533 = vpop.f32.mrb[0].mxu0
        %v534 = vadd.f32 0.0, %v533
        %v535 = vpop.f32.mrb[0].mxu0
        %v536 = vadd.f32 0.0, %v535
        %v537 = vpop.f32.mrb[0].mxu0
        %v538 = vadd.f32 0.0, %v537
        %539 = vmatprep.mubr.bf16.mxu0 0
        %540 = vmatmul.mubr.bf16.gmra.mrb[0].mxu0 %v313
        %v541 = vpop.f32.mrb[0].mxu0
        %v542 = vadd.f32 0.0, %v541
        %v543 = vpop.f32.mrb[0].mxu0
        %v544 = vadd.f32 0.0, %v543
        %v545 = vpop.f32.mrb[0].mxu0
        %v546 = vadd.f32 0.0, %v545
        %v547 = vpop.f32.mrb[0].mxu0
        %v548 = vadd.f32 0.0, %v547
        %549 = vmatprep.mubr.bf16.mxu0 0
        %550 = vmatmul.mubr.bf16.gmra.mrb[0].mxu0 %v316
        %v551 = vpop.f32.mrb[0].mxu0
        %v552 = vadd.f32 0.0, %v551
        %v553 = vpop.f32.mrb[0].mxu0
        %v554 = vadd.f32 0.0, %v553
        %v555 = vpop.f32.mrb[0].mxu0
        %v556 = vadd.f32 0.0, %v555
        %v557 = vpop.f32.mrb[0].mxu0
        %v558 = vadd.f32 0.0, %v557
        %559 = vdwg.mxu0
        %v560 = vld [vmem:[#allocation3] sm:$0xff]
        %v561 = vld [vmem:[#allocation3 + $0x8] sm:$0xff]
        %v562 = vld [vmem:[#allocation3 + $0x10] sm:$0xff]
        %v563 = vld [vmem:[#allocation3 + $0x18] sm:$0xff]
        %v564 = vld [vmem:[#allocation3 + $0x20] sm:$0xff]
        %v565 = vld [vmem:[#allocation3 + $0x28] sm:$0xff]
        %v566 = vld [vmem:[#allocation3 + $0x30] sm:$0xff]
        %v567 = vld [vmem:[#allocation3 + $0x38] sm:$0xff]
        %v568 = vadd.f32 %v449, %v451
        %v569 = vadd.f32 %v568, %v522
        %v570 = vadd.f32 %v569, %v524
        %571 = vadd.xlane.f32.xlu0 %v570
        %v572 = vpop.xlane.xlu0 %571
        %v573 = vadd.f32 %v453, %v455
        %v574 = vadd.f32 %v573, %v526
        %v575 = vadd.f32 %v574, %v528
        %576 = vadd.xlane.f32.xlu0 %v575
        %v577 = vpop.xlane.xlu0 %576
        %v578 = vadd.f32 %v459, %v461
        %v579 = vadd.f32 %v578, %v532
        %v580 = vadd.f32 %v579, %v534
        %581 = vadd.xlane.f32.xlu0 %v580
        %v582 = vpop.xlane.xlu0 %581
        %v583 = vadd.f32 %v463, %v465
        %v584 = vadd.f32 %v583, %v536
        %v585 = vadd.f32 %v584, %v538
        %586 = vadd.xlane.f32.xlu0 %v585
        %v587 = vpop.xlane.xlu0 %586
        %v588 = vadd.f32 %v469, %v471
        %v589 = vadd.f32 %v588, %v542
        %v590 = vadd.f32 %v589, %v544
        %591 = vadd.xlane.f32.xlu0 %v590
        %v592 = vpop.xlane.xlu0 %591
        %v593 = vadd.f32 %v473, %v475
        %v594 = vadd.f32 %v593, %v546
        %v595 = vadd.f32 %v594, %v548
        %596 = vadd.xlane.f32.xlu0 %v595
        %v597 = vpop.xlane.xlu0 %596
        %v598 = vadd.f32 %v479, %v481
        %v599 = vadd.f32 %v598, %v552
        %v600 = vadd.f32 %v599, %v554
        %601 = vadd.xlane.f32.xlu0 %v600
        %v602 = vpop.xlane.xlu0 %601
        %v603 = vadd.f32 %v483, %v485
        %v604 = vadd.f32 %v603, %v556
        %v605 = vadd.f32 %v604, %v558
        %606 = vadd.xlane.f32.xlu0 %v605
        %v607 = vpop.xlane.xlu0 %606
        %v608 = vadd.f32 %v560, %v572
        %v609 = vadd.f32 %v561, %v577
        %v610 = vadd.f32 %v562, %v582
        %v611 = vadd.f32 %v563, %v587
        %v612 = vadd.f32 %v564, %v592
        %v613 = vadd.f32 %v565, %v597
        %v614 = vadd.f32 %v566, %v602
        %v615 = vadd.f32 %v567, %v607
        %vm616 = vcmask 7168
        %617 = vst.msk [vmem:[#allocation3] sm:$0xff] %vm616, %v608
        %618 = vst.msk [vmem:[#allocation3 + $0x8] sm:$0xff] %vm616, %v609
        %619 = vst.msk [vmem:[#allocation3 + $0x10] sm:$0xff] %vm616, %v610
        %620 = vst.msk [vmem:[#allocation3 + $0x18] sm:$0xff] %vm616, %v611
        %621 = vst.msk [vmem:[#allocation3 + $0x20] sm:$0xff] %vm616, %v612
        %622 = vst.msk [vmem:[#allocation3 + $0x28] sm:$0xff] %vm616, %v613
        %623 = vst.msk [vmem:[#allocation3 + $0x30] sm:$0xff] %vm616, %v614
        %624 = vst.msk [vmem:[#allocation3 + $0x38] sm:$0xff] %vm616, %v615
        %v625 = vld [vmem:[#allocation4] sm:$0xff]
        %v626 = vld [vmem:[#allocation4 + $0x8] sm:$0xff]
        %v627 = vld [vmem:[#allocation4 + $0x10] sm:$0xff]
        %v628 = vld [vmem:[#allocation4 + $0x18] sm:$0xff]
        %v629 = vld [vmem:[#allocation4 + $0x20] sm:$0xff]
        %v630 = vld [vmem:[#allocation4 + $0x28] sm:$0xff]
        %v631 = vld [vmem:[#allocation4 + $0x30] sm:$0xff]
        %v632 = vld [vmem:[#allocation4 + $0x38] sm:$0xff]
        %v633 = vmul.f32 %v449, %v449
        %v634 = vmul.f32 %v451, %v451
        %v635 = vmul.f32 %v522, %v522
        %v636 = vmul.f32 %v524, %v524
        %v637 = vmul.f32 %v453, %v453
        %v638 = vmul.f32 %v455, %v455
        %v639 = vmul.f32 %v526, %v526
        %v640 = vmul.f32 %v528, %v528
        %v641 = vmul.f32 %v459, %v459
        %v642 = vmul.f32 %v461, %v461
        %v643 = vmul.f32 %v532, %v532
        %v644 = vmul.f32 %v534, %v534
        %v645 = vmul.f32 %v463, %v463
        %v646 = vmul.f32 %v465, %v465
        %v647 = vmul.f32 %v536, %v536
        %v648 = vmul.f32 %v538, %v538
        %v649 = vmul.f32 %v469, %v469
        %v650 = vmul.f32 %v471, %v471
        %v651 = vmul.f32 %v542, %v542
        %v652 = vmul.f32 %v544, %v544
        %v653 = vmul.f32 %v473, %v473
        %v654 = vmul.f32 %v475, %v475
        %v655 = vmul.f32 %v546, %v546
        %v656 = vmul.f32 %v548, %v548
        %v657 = vmul.f32 %v479, %v479
        %v658 = vmul.f32 %v481, %v481
        %v659 = vmul.f32 %v552, %v552
        %v660 = vmul.f32 %v554, %v554
        %v661 = vmul.f32 %v483, %v483
        %v662 = vmul.f32 %v485, %v485
        %v663 = vmul.f32 %v556, %v556
        %v664 = vmul.f32 %v558, %v558
        %v665 = vadd.f32 %v633, %v634
        %v666 = vadd.f32 %v665, %v635
        %v667 = vadd.f32 %v666, %v636
        %668 = vadd.xlane.f32.xlu0 %v667
        %v669 = vpop.xlane.xlu0 %668
        %v670 = vadd.f32 %v637, %v638
        %v671 = vadd.f32 %v670, %v639
        %v672 = vadd.f32 %v671, %v640
        %673 = vadd.xlane.f32.xlu0 %v672
        %v674 = vpop.xlane.xlu0 %673
        %v675 = vadd.f32 %v641, %v642
        %v676 = vadd.f32 %v675, %v643
        %v677 = vadd.f32 %v676, %v644
        %678 = vadd.xlane.f32.xlu0 %v677
        %v679 = vpop.xlane.xlu0 %678
        %v680 = vadd.f32 %v645, %v646
        %v681 = vadd.f32 %v680, %v647
        %v682 = vadd.f32 %v681, %v648
        %683 = vadd.xlane.f32.xlu0 %v682
        %v684 = vpop.xlane.xlu0 %683
        %v685 = vadd.f32 %v649, %v650
        %v686 = vadd.f32 %v685, %v651
        %v687 = vadd.f32 %v686, %v652
        %688 = vadd.xlane.f32.xlu0 %v687
        %v689 = vpop.xlane.xlu0 %688
        %v690 = vadd.f32 %v653, %v654
        %v691 = vadd.f32 %v690, %v655
        %v692 = vadd.f32 %v691, %v656
        %693 = vadd.xlane.f32.xlu0 %v692
        %v694 = vpop.xlane.xlu0 %693
        %v695 = vadd.f32 %v657, %v658
        %v696 = vadd.f32 %v695, %v659
        %v697 = vadd.f32 %v696, %v660
        %698 = vadd.xlane.f32.xlu0 %v697
        %v699 = vpop.xlane.xlu0 %698
        %v700 = vadd.f32 %v661, %v662
        %v701 = vadd.f32 %v700, %v663
        %v702 = vadd.f32 %v701, %v664
        %703 = vadd.xlane.f32.xlu0 %v702
        %v704 = vpop.xlane.xlu0 %703
        %v705 = vadd.f32 %v625, %v669
        %v706 = vadd.f32 %v626, %v674
        %v707 = vadd.f32 %v627, %v679
        %v708 = vadd.f32 %v628, %v684
        %v709 = vadd.f32 %v629, %v689
        %v710 = vadd.f32 %v630, %v694
        %v711 = vadd.f32 %v631, %v699
        %v712 = vadd.f32 %v632, %v704
        %713 = vst.msk [vmem:[#allocation4] sm:$0xff] %vm616, %v705
        %714 = vst.msk [vmem:[#allocation4 + $0x8] sm:$0xff] %vm616, %v706
        %715 = vst.msk [vmem:[#allocation4 + $0x10] sm:$0xff] %vm616, %v707
        %716 = vst.msk [vmem:[#allocation4 + $0x18] sm:$0xff] %vm616, %v708
        %717 = vst.msk [vmem:[#allocation4 + $0x20] sm:$0xff] %vm616, %v709
        %718 = vst.msk [vmem:[#allocation4 + $0x28] sm:$0xff] %vm616, %v710
        %719 = vst.msk [vmem:[#allocation4 + $0x30] sm:$0xff] %vm616, %v711
        %720 = vst.msk [vmem:[#allocation4 + $0x38] sm:$0xff] %vm616, %v712
        %v721 = vpack.c.bf16 %v453, %v449
        %v722 = vpack.c.bf16 %v455, %v451
        %v723 = vpack.c.bf16 %v526, %v522
        %v724 = vpack.c.bf16 %v528, %v524
        %v725 = vpack.c.bf16 %v463, %v459
        %v726 = vpack.c.bf16 %v465, %v461
        %v727 = vpack.c.bf16 %v536, %v532
        %v728 = vpack.c.bf16 %v538, %v534
        %v729 = vpack.c.bf16 %v473, %v469
        %v730 = vpack.c.bf16 %v475, %v471
        %v731 = vpack.c.bf16 %v546, %v542
        %v732 = vpack.c.bf16 %v548, %v544
        %v733 = vpack.c.bf16 %v483, %v479
        %v734 = vpack.c.bf16 %v485, %v481
        %v735 = vpack.c.bf16 %v556, %v552
        %v736 = vpack.c.bf16 %v558, %v554
        // Predicated region
        $region37: #{congestion_forward.1} parent=31 // pred_check
          %p737 = pneg %p160
        $region38: #{congestion_forward.1} parent=31 // pred_check_branch
          %739 = sbr.rel (%p737) target = $region40
        $region39: #{congestion_forward.1} parent=31 // pred_region
          %740 = vst [vmem:[#allocation2] sm:$0xff] %v721
          %741 = vst [vmem:[#allocation2 + $0x8] sm:$0xff] %v722
          %742 = vst [vmem:[#allocation2 + $0x10] sm:$0xff] %v723
          %743 = vst [vmem:[#allocation2 + $0x18] sm:$0xff] %v724
          %744 = vst [vmem:[#allocation2 + $0x40] sm:$0xff] %v725
          %745 = vst [vmem:[#allocation2 + $0x48] sm:$0xff] %v726
          %746 = vst [vmem:[#allocation2 + $0x50] sm:$0xff] %v727
          %747 = vst [vmem:[#allocation2 + $0x58] sm:$0xff] %v728
          %748 = vst [vmem:[#allocation2 + $0x80] sm:$0xff] %v729
          %749 = vst [vmem:[#allocation2 + $0x88] sm:$0xff] %v730
          %750 = vst [vmem:[#allocation2 + $0x90] sm:$0xff] %v731
          %751 = vst [vmem:[#allocation2 + $0x98] sm:$0xff] %v732
          %752 = vst [vmem:[#allocation2 + $0xc0] sm:$0xff] %v733
          %753 = vst [vmem:[#allocation2 + $0xc8] sm:$0xff] %v734
          %754 = vst [vmem:[#allocation2 + $0xd0] sm:$0xff] %v735
          %755 = vst [vmem:[#allocation2 + $0xd8] sm:$0xff] %v736
        $region40: #{congestion_forward.1} parent=31 // pred_fallthru
          _
        %p756 = scmp.eq.s32.totalorder %s15, 1
        // Predicated region
        $region41: #{congestion_forward.1} parent=31 // pred_check
          %p757 = pneg %p756
        $region42: #{congestion_forward.1} parent=31 // pred_check_branch
          %759 = sbr.rel (%p757) target = $region44
        $region43: #{congestion_forward.1} parent=31 // pred_region
          %760 = vst [vmem:[#allocation2 + $0x20] sm:$0xff] %v721
          %761 = vst [vmem:[#allocation2 + $0x28] sm:$0xff] %v722
          %762 = vst [vmem:[#allocation2 + $0x30] sm:$0xff] %v723
          %763 = vst [vmem:[#allocation2 + $0x38] sm:$0xff] %v724
          %764 = vst [vmem:[#allocation2 + $0x60] sm:$0xff] %v725
          %765 = vst [vmem:[#allocation2 + $0x68] sm:$0xff] %v726
          %766 = vst [vmem:[#allocation2 + $0x70] sm:$0xff] %v727
          %767 = vst [vmem:[#allocation2 + $0x78] sm:$0xff] %v728
          %768 = vst [vmem:[#allocation2 + $0xa0] sm:$0xff] %v729
          %769 = vst [vmem:[#allocation2 + $0xa8] sm:$0xff] %v730
          %770 = vst [vmem:[#allocation2 + $0xb0] sm:$0xff] %v731
          %771 = vst [vmem:[#allocation2 + $0xb8] sm:$0xff] %v732
          %772 = vst [vmem:[#allocation2 + $0xe0] sm:$0xff] %v733
          %773 = vst [vmem:[#allocation2 + $0xe8] sm:$0xff] %v734
          %774 = vst [vmem:[#allocation2 + $0xf0] sm:$0xff] %v735
          %775 = vst [vmem:[#allocation2 + $0xf8] sm:$0xff] %v736
          %v776 = vld [vmem:[%s2] sm:$0xff]
          %v777 = vld [vmem:[%s2 + $0x8] sm:$0xff]
          %v778 = vld [vmem:[%s2 + $0x10] sm:$0xff]
          %v779 = vld [vmem:[%s2 + $0x18] sm:$0xff]
          %v780 = vld [vmem:[%s2 + $0x20] sm:$0xff]
          %v781 = vld [vmem:[%s2 + $0x28] sm:$0xff]
          %v782 = vld [vmem:[%s2 + $0x30] sm:$0xff]
          %v783 = vld [vmem:[%s2 + $0x38] sm:$0xff]
          %v784 = vld [vmem:[%s2] sm:$0xf]
          %v785 = vld [vmem:[#allocation3] sm:$0xff]
          %v786 = vld [vmem:[#allocation3 + $0x8] sm:$0xff]
          %v787 = vld [vmem:[#allocation3 + $0x10] sm:$0xff]
          %v788 = vld [vmem:[#allocation3 + $0x18] sm:$0xff]
          %v789 = vld [vmem:[#allocation3 + $0x20] sm:$0xff]
          %v790 = vld [vmem:[#allocation3 + $0x28] sm:$0xff]
          %v791 = vld [vmem:[#allocation3 + $0x30] sm:$0xff]
          %v792 = vld [vmem:[#allocation3 + $0x38] sm:$0xff]
          %v793 = vld [vmem:[#allocation4] sm:$0xff]
          %v794 = vld [vmem:[#allocation4 + $0x8] sm:$0xff]
          %v795 = vld [vmem:[#allocation4 + $0x10] sm:$0xff]
          %v796 = vld [vmem:[#allocation4 + $0x18] sm:$0xff]
          %v797 = vld [vmem:[#allocation4 + $0x20] sm:$0xff]
          %v798 = vld [vmem:[#allocation4 + $0x28] sm:$0xff]
          %v799 = vld [vmem:[#allocation4 + $0x30] sm:$0xff]
          %v800 = vld [vmem:[#allocation4 + $0x38] sm:$0xff]
          %v801 = vmul.f32 %v785, 0.0009765625
          %v802 = vmul.f32 %v786, 0.0009765625
          %v803 = vmul.f32 %v787, 0.0009765625
          %v804 = vmul.f32 %v788, 0.0009765625
          %v805 = vmul.f32 %v789, 0.0009765625
          %v806 = vmul.f32 %v790, 0.0009765625
          %v807 = vmul.f32 %v791, 0.0009765625
          %v808 = vmul.f32 %v792, 0.0009765625
          %v809 = vmul.f32 %v793, 0.0009765625
          %v810 = vmul.f32 %v794, 0.0009765625
          %v811 = vmul.f32 %v795, 0.0009765625
          %v812 = vmul.f32 %v796, 0.0009765625
          %v813 = vmul.f32 %v797, 0.0009765625
          %v814 = vmul.f32 %v798, 0.0009765625
          %v815 = vmul.f32 %v799, 0.0009765625
          %v816 = vmul.f32 %v800, 0.0009765625
          %v817 = vmul.f32 %v801, %v801
          %v818 = vmul.f32 %v802, %v802
          %v819 = vmul.f32 %v803, %v803
          %v820 = vmul.f32 %v804, %v804
          %v821 = vmul.f32 %v805, %v805
          %v822 = vmul.f32 %v806, %v806
          %v823 = vmul.f32 %v807, %v807
          %v824 = vmul.f32 %v808, %v808
          %v825 = vsub.f32 %v809, %v817
          %v826 = vsub.f32 %v810, %v818
          %v827 = vsub.f32 %v811, %v819
          %v828 = vsub.f32 %v812, %v820
          %v829 = vsub.f32 %v813, %v821
          %v830 = vsub.f32 %v814, %v822
          %v831 = vsub.f32 %v815, %v823
          %v832 = vsub.f32 %v816, %v824
          %v833 = vmax.f32 %v825, 0.0
          %v834 = vmax.f32 %v826, 0.0
          %v835 = vmax.f32 %v827, 0.0
          %v836 = vmax.f32 %v828, 0.0
          %v837 = vmax.f32 %v829, 0.0
          %v838 = vmax.f32 %v830, 0.0
          %v839 = vmax.f32 %v831, 0.0
          %v840 = vmax.f32 %v832, 0.0
          %v841 = vadd.f32 %v833, 1e-05
          %v842 = vadd.f32 %v834, 1e-05
          %v843 = vadd.f32 %v835, 1e-05
          %v844 = vadd.f32 %v836, 1e-05
          %v845 = vadd.f32 %v837, 1e-05
          %v846 = vadd.f32 %v838, 1e-05
          %v847 = vadd.f32 %v839, 1e-05
          %v848 = vadd.f32 %v840, 1e-05
          %v849 = vrsqrt.pop %v841
          %v850 = vrsqrt.pop %v842
          %v851 = vrsqrt.pop %v843
          %v852 = vrsqrt.pop %v844
          %v853 = vrsqrt.pop %v845
          %v854 = vrsqrt.pop %v846
          %v855 = vrsqrt.pop %v847
          %v856 = vrsqrt.pop %v848
          %v857 = vmul.f32 %v776, %v849
          %v858 = vmul.f32 %v777, %v850
          %v859 = vmul.f32 %v778, %v851
          %v860 = vmul.f32 %v779, %v852
          %v861 = vmul.f32 %v780, %v853
          %v862 = vmul.f32 %v781, %v854
          %v863 = vmul.f32 %v782, %v855
          %v864 = vmul.f32 %v783, %v856
          %v865 = vmul.f32 %v801, %v857
          %v866 = vmul.f32 %v802, %v858
          %v867 = vmul.f32 %v803, %v859
          %v868 = vmul.f32 %v804, %v860
          %v869 = vmul.f32 %v805, %v861
          %v870 = vmul.f32 %v806, %v862
          %v871 = vmul.f32 %v807, %v863
          %v872 = vmul.f32 %v808, %v864
          %881 = vrot.lane.b32.xlu0 %v865, 1
          %v882 = vpop.permute.xlu0 %881
          %883 = vrot.lane.b32.xlu0 %v866, 1
          %v884 = vpop.permute.xlu0 %883
          %885 = vrot.lane.b32.xlu0 %v867, 1
          %v886 = vpop.permute.xlu0 %885
          %887 = vrot.lane.b32.xlu0 %v868, 1
          %v888 = vpop.permute.xlu0 %887
          %889 = vrot.lane.b32.xlu0 %v869, 1
          %v890 = vpop.permute.xlu0 %889
          %891 = vrot.lane.b32.xlu0 %v870, 1
          %v892 = vpop.permute.xlu0 %891
          %893 = vrot.lane.b32.xlu0 %v871, 1
          %v894 = vpop.permute.xlu0 %893
          %895 = vrot.lane.b32.xlu0 %v872, 1
          %v896 = vpop.permute.xlu0 %895
          %v905 = vsub.f32 %v776, %v882
          %v906 = vsub.f32 %v777, %v884
          %v907 = vsub.f32 %v778, %v886
          %v908 = vsub.f32 %v779, %v888
          %v909 = vsub.f32 %v780, %v890
          %v910 = vsub.f32 %v781, %v892
          %v911 = vsub.f32 %v782, %v894
          %v912 = vsub.f32 %v783, %v896
          %v913 = vld [vmem:[#allocation2] sm:$0xff]
          %v914 = vld [vmem:[#allocation2 + $0x8] sm:$0xff]
          %v915 = vld [vmem:[#allocation2 + $0x10] sm:$0xff]
          %v916 = vld [vmem:[#allocation2 + $0x18] sm:$0xff]
          %v917 = vld [vmem:[#allocation2 + $0x20] sm:$0xff]
          %v918 = vld [vmem:[#allocation2 + $0x28] sm:$0xff]
          %v919 = vld [vmem:[#allocation2 + $0x30] sm:$0xff]
          %v920 = vld [vmem:[#allocation2 + $0x38] sm:$0xff]
          %v921 = vld [vmem:[#allocation2 + $0x40] sm:$0xff]
          %v922 = vld [vmem:[#allocation2 + $0x48] sm:$0xff]
          %v923 = vld [vmem:[#allocation2 + $0x50] sm:$0xff]
          %v924 = vld [vmem:[#allocation2 + $0x58] sm:$0xff]
          %v925 = vld [vmem:[#allocation2 + $0x60] sm:$0xff]
          %v926 = vld [vmem:[#allocation2 + $0x68] sm:$0xff]
          %v927 = vld [vmem:[#allocation2 + $0x70] sm:$0xff]
          %v928 = vld [vmem:[#allocation2 + $0x78] sm:$0xff]
          %v929 = vld [vmem:[#allocation2 + $0x80] sm:$0xff]
          %v930 = vld [vmem:[#allocation2 + $0x88] sm:$0xff]
          %v931 = vld [vmem:[#allocation2 + $0x90] sm:$0xff]
          %v932 = vld [vmem:[#allocation2 + $0x98] sm:$0xff]
          %v933 = vld [vmem:[#allocation2 + $0xa0] sm:$0xff]
          %v934 = vld [vmem:[#allocation2 + $0xa8] sm:$0xff]
          %v935 = vld [vmem:[#allocation2 + $0xb0] sm:$0xff]
          %v936 = vld [vmem:[#allocation2 + $0xb8] sm:$0xff]
          %v937 = vld [vmem:[#allocation2 + $0xc0] sm:$0xff]
          %v938 = vld [vmem:[#allocation2 + $0xc8] sm:$0xff]
          %v939 = vld [vmem:[#allocation2 + $0xd0] sm:$0xff]
          %v940 = vld [vmem:[#allocation2 + $0xd8] sm:$0xff]
          %v941 = vld [vmem:[#allocation2 + $0xe0] sm:$0xff]
          %v942 = vld [vmem:[#allocation2 + $0xe8] sm:$0xff]
          %v943 = vld [vmem:[#allocation2 + $0xf0] sm:$0xff]
          %v944 = vld [vmem:[#allocation2 + $0xf8] sm:$0xff]
          %v945 = vunpack.c.l.bf16 %v913
          %v946 = vunpack.c.l.bf16 %v914
          %v947 = vunpack.c.l.bf16 %v915
          %v948 = vunpack.c.l.bf16 %v916
          %v949 = vunpack.c.l.bf16 %v917
          %v950 = vunpack.c.l.bf16 %v918
          %v951 = vunpack.c.l.bf16 %v919
          %v952 = vunpack.c.l.bf16 %v920
          %v953 = vunpack.c.h.bf16 %v913
          %v954 = vunpack.c.h.bf16 %v914
          %v955 = vunpack.c.h.bf16 %v915
          %v956 = vunpack.c.h.bf16 %v916
          %v957 = vunpack.c.h.bf16 %v917
          %v958 = vunpack.c.h.bf16 %v918
          %v959 = vunpack.c.h.bf16 %v919
          %v960 = vunpack.c.h.bf16 %v920
          %v961 = vunpack.c.l.bf16 %v921
          %v962 = vunpack.c.l.bf16 %v922
          %v963 = vunpack.c.l.bf16 %v923
          %v964 = vunpack.c.l.bf16 %v924
          %v965 = vunpack.c.l.bf16 %v925
          %v966 = vunpack.c.l.bf16 %v926
          %v967 = vunpack.c.l.bf16 %v927
          %v968 = vunpack.c.l.bf16 %v928
          %v969 = vunpack.c.h.bf16 %v921
          %v970 = vunpack.c.h.bf16 %v922
          %v971 = vunpack.c.h.bf16 %v923
          %v972 = vunpack.c.h.bf16 %v924
          %v973 = vunpack.c.h.bf16 %v925
          %v974 = vunpack.c.h.bf16 %v926
          %v975 = vunpack.c.h.bf16 %v927
          %v976 = vunpack.c.h.bf16 %v928
          %v977 = vunpack.c.l.bf16 %v929
          %v978 = vunpack.c.l.bf16 %v930
          %v979 = vunpack.c.l.bf16 %v931
          %v980 = vunpack.c.l.bf16 %v932
          %v981 = vunpack.c.l.bf16 %v933
          %v982 = vunpack.c.l.bf16 %v934
          %v983 = vunpack.c.l.bf16 %v935
          %v984 = vunpack.c.l.bf16 %v936
          %v985 = vunpack.c.h.bf16 %v929
          %v986 = vunpack.c.h.bf16 %v930
          %v987 = vunpack.c.h.bf16 %v931
          %v988 = vunpack.c.h.bf16 %v932
          %v989 = vunpack.c.h.bf16 %v933
          %v990 = vunpack.c.h.bf16 %v934
          %v991 = vunpack.c.h.bf16 %v935
          %v992 = vunpack.c.h.bf16 %v936
          %v993 = vunpack.c.l.bf16 %v937
          %v994 = vunpack.c.l.bf16 %v938
          %v995 = vunpack.c.l.bf16 %v939
          %v996 = vunpack.c.l.bf16 %v940
          %v997 = vunpack.c.l.bf16 %v941
          %v998 = vunpack.c.l.bf16 %v942
          %v999 = vunpack.c.l.bf16 %v943
          %v1000 = vunpack.c.l.bf16 %v944
          %v1001 = vunpack.c.h.bf16 %v937
          %v1002 = vunpack.c.h.bf16 %v938
          %v1003 = vunpack.c.h.bf16 %v939
          %v1004 = vunpack.c.h.bf16 %v940
          %v1005 = vunpack.c.h.bf16 %v941
          %v1006 = vunpack.c.h.bf16 %v942
          %v1007 = vunpack.c.h.bf16 %v943
          %v1008 = vunpack.c.h.bf16 %v944
          %1010 = vset.pattern.permute.xlu0 0
          %1011 = vperm.xlu0 %1010, %v857
          %v1012 = vpop.permute.xlu0 %1011
          %1015 = vset.pattern.permute.xlu0 0
          %1016 = vperm.xlu0 %1015, %v858
          %v1017 = vpop.permute.xlu0 %1016
          %1020 = vset.pattern.permute.xlu0 0
          %1021 = vperm.xlu0 %1020, %v859
          %v1022 = vpop.permute.xlu0 %1021
          %1025 = vset.pattern.permute.xlu0 0
          %1026 = vperm.xlu0 %1025, %v860
          %v1027 = vpop.permute.xlu0 %1026
          %1030 = vset.pattern.permute.xlu0 0
          %1031 = vperm.xlu0 %1030, %v861
          %v1032 = vpop.permute.xlu0 %1031
          %1035 = vset.pattern.permute.xlu0 0
          %1036 = vperm.xlu0 %1035, %v862
          %v1037 = vpop.permute.xlu0 %1036
          %1040 = vset.pattern.permute.xlu0 0
          %1041 = vperm.xlu0 %1040, %v863
          %v1042 = vpop.permute.xlu0 %1041
          %1045 = vset.pattern.permute.xlu0 0
          %1046 = vperm.xlu0 %1045, %v864
          %v1047 = vpop.permute.xlu0 %1046
          %v1049 = vmul.f32 %v945, %v1012
          %v1050 = vmul.f32 %v946, %v1012
          %v1051 = vmul.f32 %v947, %v1012
          %v1052 = vmul.f32 %v948, %v1012
          %v1053 = vmul.f32 %v949, %v1012
          %v1054 = vmul.f32 %v950, %v1012
          %v1055 = vmul.f32 %v951, %v1012
          %v1056 = vmul.f32 %v952, %v1012
          %v1057 = vmul.f32 %v953, %v1017
          %v1058 = vmul.f32 %v954, %v1017
          %v1059 = vmul.f32 %v955, %v1017
          %v1060 = vmul.f32 %v956, %v1017
          %v1061 = vmul.f32 %v957, %v1017
          %v1062 = vmul.f32 %v958, %v1017
          %v1063 = vmul.f32 %v959, %v1017
          %v1064 = vmul.f32 %v960, %v1017
          %v1065 = vmul.f32 %v961, %v1022
          %v1066 = vmul.f32 %v962, %v1022
          %v1067 = vmul.f32 %v963, %v1022
          %v1068 = vmul.f32 %v964, %v1022
          %v1069 = vmul.f32 %v965, %v1022
          %v1070 = vmul.f32 %v966, %v1022
          %v1071 = vmul.f32 %v967, %v1022
          %v1072 = vmul.f32 %v968, %v1022
          %v1073 = vmul.f32 %v969, %v1027
          %v1074 = vmul.f32 %v970, %v1027
          %v1075 = vmul.f32 %v971, %v1027
          %v1076 = vmul.f32 %v972, %v1027
          %v1077 = vmul.f32 %v973, %v1027
          %v1078 = vmul.f32 %v974, %v1027
          %v1079 = vmul.f32 %v975, %v1027
          %v1080 = vmul.f32 %v976, %v1027
          %v1081 = vmul.f32 %v977, %v1032
          %v1082 = vmul.f32 %v978, %v1032
          %v1083 = vmul.f32 %v979, %v1032
          %v1084 = vmul.f32 %v980, %v1032
          %v1085 = vmul.f32 %v981, %v1032
          %v1086 = vmul.f32 %v982, %v1032
          %v1087 = vmul.f32 %v983, %v1032
          %v1088 = vmul.f32 %v984, %v1032
          %v1089 = vmul.f32 %v985, %v1037
          %v1090 = vmul.f32 %v986, %v1037
          %v1091 = vmul.f32 %v987, %v1037
          %v1092 = vmul.f32 %v988, %v1037
          %v1093 = vmul.f32 %v989, %v1037
          %v1094 = vmul.f32 %v990, %v1037
          %v1095 = vmul.f32 %v991, %v1037
          %v1096 = vmul.f32 %v992, %v1037
          %v1097 = vmul.f32 %v993, %v1042
          %v1098 = vmul.f32 %v994, %v1042
          %v1099 = vmul.f32 %v995, %v1042
          %v1100 = vmul.f32 %v996, %v1042
          %v1101 = vmul.f32 %v997, %v1042
          %v1102 = vmul.f32 %v998, %v1042
          %v1103 = vmul.f32 %v999, %v1042
          %v1104 = vmul.f32 %v1000, %v1042
          %v1105 = vmul.f32 %v1001, %v1047
          %v1106 = vmul.f32 %v1002, %v1047
          %v1107 = vmul.f32 %v1003, %v1047
          %v1108 = vmul.f32 %v1004, %v1047
          %v1109 = vmul.f32 %v1005, %v1047
          %v1110 = vmul.f32 %v1006, %v1047
          %v1111 = vmul.f32 %v1007, %v1047
          %v1112 = vmul.f32 %v1008, %v1047
          %1114 = vset.pattern.permute.xlu0 1
          %1115 = vperm.xlu0 %1114, %v905
          %v1116 = vpop.permute.xlu0 %1115
          %1119 = vset.pattern.permute.xlu0 1
          %1120 = vperm.xlu0 %1119, %v906
          %v1121 = vpop.permute.xlu0 %1120
          %1124 = vset.pattern.permute.xlu0 1
          %1125 = vperm.xlu0 %1124, %v907
          %v1126 = vpop.permute.xlu0 %1125
          %1129 = vset.pattern.permute.xlu0 1
          %1130 = vperm.xlu0 %1129, %v908
          %v1131 = vpop.permute.xlu0 %1130
          %1134 = vset.pattern.permute.xlu0 1
          %1135 = vperm.xlu0 %1134, %v909
          %v1136 = vpop.permute.xlu0 %1135
          %1139 = vset.pattern.permute.xlu0 1
          %1140 = vperm.xlu0 %1139, %v910
          %v1141 = vpop.permute.xlu0 %1140
          %1144 = vset.pattern.permute.xlu0 1
          %1145 = vperm.xlu0 %1144, %v911
          %v1146 = vpop.permute.xlu0 %1145
          %1149 = vset.pattern.permute.xlu0 1
          %1150 = vperm.xlu0 %1149, %v912
          %v1151 = vpop.permute.xlu0 %1150
          %v1153 = vadd.f32 %v1049, %v1116
          %v1154 = vadd.f32 %v1050, %v1116
          %v1155 = vadd.f32 %v1051, %v1116
          %v1156 = vadd.f32 %v1052, %v1116
          %v1157 = vadd.f32 %v1053, %v1116
          %v1158 = vadd.f32 %v1054, %v1116
          %v1159 = vadd.f32 %v1055, %v1116
          %v1160 = vadd.f32 %v1056, %v1116
          %v1161 = vadd.f32 %v1057, %v1121
          %v1162 = vadd.f32 %v1058, %v1121
          %v1163 = vadd.f32 %v1059, %v1121
          %v1164 = vadd.f32 %v1060, %v1121
          %v1165 = vadd.f32 %v1061, %v1121
          %v1166 = vadd.f32 %v1062, %v1121
          %v1167 = vadd.f32 %v1063, %v1121
          %v1168 = vadd.f32 %v1064, %v1121
          %v1169 = vadd.f32 %v1065, %v1126
          %v1170 = vadd.f32 %v1066, %v1126
          %v1171 = vadd.f32 %v1067, %v1126
          %v1172 = vadd.f32 %v1068, %v1126
          %v1173 = vadd.f32 %v1069, %v1126
          %v1174 = vadd.f32 %v1070, %v1126
          %v1175 = vadd.f32 %v1071, %v1126
          %v1176 = vadd.f32 %v1072, %v1126
          %v1177 = vadd.f32 %v1073, %v1131
          %v1178 = vadd.f32 %v1074, %v1131
          %v1179 = vadd.f32 %v1075, %v1131
          %v1180 = vadd.f32 %v1076, %v1131
          %v1181 = vadd.f32 %v1077, %v1131
          %v1182 = vadd.f32 %v1078, %v1131
          %v1183 = vadd.f32 %v1079, %v1131
          %v1184 = vadd.f32 %v1080, %v1131
          %v1185 = vadd.f32 %v1081, %v1136
          %v1186 = vadd.f32 %v1082, %v1136
          %v1187 = vadd.f32 %v1083, %v1136
          %v1188 = vadd.f32 %v1084, %v1136
          %v1189 = vadd.f32 %v1085, %v1136
          %v1190 = vadd.f32 %v1086, %v1136
          %v1191 = vadd.f32 %v1087, %v1136
          %v1192 = vadd.f32 %v1088, %v1136
          %v1193 = vadd.f32 %v1089, %v1141
          %v1194 = vadd.f32 %v1090, %v1141
          %v1195 = vadd.f32 %v1091, %v1141
          %v1196 = vadd.f32 %v1092, %v1141
          %v1197 = vadd.f32 %v1093, %v1141
          %v1198 = vadd.f32 %v1094, %v1141
          %v1199 = vadd.f32 %v1095, %v1141
          %v1200 = vadd.f32 %v1096, %v1141
          %v1201 = vadd.f32 %v1097, %v1146
          %v1202 = vadd.f32 %v1098, %v1146
          %v1203 = vadd.f32 %v1099, %v1146
          %v1204 = vadd.f32 %v1100, %v1146
          %v1205 = vadd.f32 %v1101, %v1146
          %v1206 = vadd.f32 %v1102, %v1146
          %v1207 = vadd.f32 %v1103, %v1146
          %v1208 = vadd.f32 %v1104, %v1146
          %v1209 = vadd.f32 %v1105, %v1151
          %v1210 = vadd.f32 %v1106, %v1151
          %v1211 = vadd.f32 %v1107, %v1151
          %v1212 = vadd.f32 %v1108, %v1151
          %v1213 = vadd.f32 %v1109, %v1151
          %v1214 = vadd.f32 %v1110, %v1151
          %v1215 = vadd.f32 %v1111, %v1151
          %v1216 = vadd.f32 %v1112, %v1151
          %v1217 = vmax.f32 %v1153, 0.0
          %v1218 = vmax.f32 %v1154, 0.0
          %v1219 = vmax.f32 %v1155, 0.0
          %v1220 = vmax.f32 %v1156, 0.0
          %v1221 = vmax.f32 %v1157, 0.0
          %v1222 = vmax.f32 %v1158, 0.0
          %v1223 = vmax.f32 %v1159, 0.0
          %v1224 = vmax.f32 %v1160, 0.0
          %v1225 = vmax.f32 %v1161, 0.0
          %v1226 = vmax.f32 %v1162, 0.0
          %v1227 = vmax.f32 %v1163, 0.0
          %v1228 = vmax.f32 %v1164, 0.0
          %v1229 = vmax.f32 %v1165, 0.0
          %v1230 = vmax.f32 %v1166, 0.0
          %v1231 = vmax.f32 %v1167, 0.0
          %v1232 = vmax.f32 %v1168, 0.0
          %v1233 = vmax.f32 %v1169, 0.0
          %v1234 = vmax.f32 %v1170, 0.0
          %v1235 = vmax.f32 %v1171, 0.0
          %v1236 = vmax.f32 %v1172, 0.0
          %v1237 = vmax.f32 %v1173, 0.0
          %v1238 = vmax.f32 %v1174, 0.0
          %v1239 = vmax.f32 %v1175, 0.0
          %v1240 = vmax.f32 %v1176, 0.0
          %v1241 = vmax.f32 %v1177, 0.0
          %v1242 = vmax.f32 %v1178, 0.0
          %v1243 = vmax.f32 %v1179, 0.0
          %v1244 = vmax.f32 %v1180, 0.0
          %v1245 = vmax.f32 %v1181, 0.0
          %v1246 = vmax.f32 %v1182, 0.0
          %v1247 = vmax.f32 %v1183, 0.0
          %v1248 = vmax.f32 %v1184, 0.0
          %v1249 = vmax.f32 %v1185, 0.0
          %v1250 = vmax.f32 %v1186, 0.0
          %v1251 = vmax.f32 %v1187, 0.0
          %v1252 = vmax.f32 %v1188, 0.0
          %v1253 = vmax.f32 %v1189, 0.0
          %v1254 = vmax.f32 %v1190, 0.0
          %v1255 = vmax.f32 %v1191, 0.0
          %v1256 = vmax.f32 %v1192, 0.0
          %v1257 = vmax.f32 %v1193, 0.0
          %v1258 = vmax.f32 %v1194, 0.0
          %v1259 = vmax.f32 %v1195, 0.0
          %v1260 = vmax.f32 %v1196, 0.0
          %v1261 = vmax.f32 %v1197, 0.0
          %v1262 = vmax.f32 %v1198, 0.0
          %v1263 = vmax.f32 %v1199, 0.0
          %v1264 = vmax.f32 %v1200, 0.0
          %v1265 = vmax.f32 %v1201, 0.0
          %v1266 = vmax.f32 %v1202, 0.0
          %v1267 = vmax.f32 %v1203, 0.0
          %v1268 = vmax.f32 %v1204, 0.0
          %v1269 = vmax.f32 %v1205, 0.0
          %v1270 = vmax.f32 %v1206, 0.0
          %v1271 = vmax.f32 %v1207, 0.0
          %v1272 = vmax.f32 %v1208, 0.0
          %v1273 = vmax.f32 %v1209, 0.0
          %v1274 = vmax.f32 %v1210, 0.0
          %v1275 = vmax.f32 %v1211, 0.0
          %v1276 = vmax.f32 %v1212, 0.0
          %v1277 = vmax.f32 %v1213, 0.0
          %v1278 = vmax.f32 %v1214, 0.0
          %v1279 = vmax.f32 %v1215, 0.0
          %v1280 = vmax.f32 %v1216, 0.0
          %v1281 = vpack.c.bf16 %v1225, %v1217
          %v1282 = vpack.c.bf16 %v1226, %v1218
          %v1283 = vpack.c.bf16 %v1227, %v1219
          %v1284 = vpack.c.bf16 %v1228, %v1220
          %v1285 = vpack.c.bf16 %v1229, %v1221
          %v1286 = vpack.c.bf16 %v1230, %v1222
          %v1287 = vpack.c.bf16 %v1231, %v1223
          %v1288 = vpack.c.bf16 %v1232, %v1224
          %v1289 = vpack.c.bf16 %v1241, %v1233
          %v1290 = vpack.c.bf16 %v1242, %v1234
          %v1291 = vpack.c.bf16 %v1243, %v1235
          %v1292 = vpack.c.bf16 %v1244, %v1236
          %v1293 = vpack.c.bf16 %v1245, %v1237
          %v1294 = vpack.c.bf16 %v1246, %v1238
          %v1295 = vpack.c.bf16 %v1247, %v1239
          %v1296 = vpack.c.bf16 %v1248, %v1240
          %v1297 = vpack.c.bf16 %v1257, %v1249
          %v1298 = vpack.c.bf16 %v1258, %v1250
          %v1299 = vpack.c.bf16 %v1259, %v1251
          %v1300 = vpack.c.bf16 %v1260, %v1252
          %v1301 = vpack.c.bf16 %v1261, %v1253
          %v1302 = vpack.c.bf16 %v1262, %v1254
          %v1303 = vpack.c.bf16 %v1263, %v1255
          %v1304 = vpack.c.bf16 %v1264, %v1256
          %v1305 = vpack.c.bf16 %v1273, %v1265
          %v1306 = vpack.c.bf16 %v1274, %v1266
          %v1307 = vpack.c.bf16 %v1275, %v1267
          %v1308 = vpack.c.bf16 %v1276, %v1268
          %v1309 = vpack.c.bf16 %v1277, %v1269
          %v1310 = vpack.c.bf16 %v1278, %v1270
          %v1311 = vpack.c.bf16 %v1279, %v1271
          %v1312 = vpack.c.bf16 %v1280, %v1272
          %v1313 = vld [vmem:[%s1 + $0x20] sm:$0xf]
          %v1314 = vld [vmem:[%s1 + $0x24] sm:$0xf]
          %v1315 = vld [vmem:[%s1 + $0x28] sm:$0xf]
          %v1316 = vld [vmem:[%s1 + $0x2c] sm:$0xf]
          %v1321 = vunpack.c.l.b16 %v1313
          %v1322 = vunpack.c.l.b16 %v1314
          %v1323 = vunpack.c.l.b16 %v1315
          %v1324 = vunpack.c.l.b16 %v1316
          %v1325 = vpack.c.b16 %v1322, %v1321
          %v1326 = vpack.c.b16 %v1324, %v1323
          %vm1327 = vcmask 523264
          %v1329 = vsel %vm1327, %v1325, 0
          %v1332 = vsel %vm1327, %v1326, 0
          %1334 = vmatprep.subr.bf16.mxu0 %v1282
          %1335 = vmatpush1.bf16.msra.mxu0 %v1281
          %1336 = vmatprep.subr.bf16.mxu0 %v1290
          %1337 = vmatpush1.bf16.msra.mxu0 %v1289
          %1338 = vmatprep.subr.bf16.mxu0 %v1298
          %1339 = vmatpush1.bf16.msra.mxu0 %v1297
          %1340 = vmatprep.subr.bf16.mxu0 %v1306
          %1341 = vmatpush1.bf16.msra.mxu0 %v1305
          %1342 = vmatprep.subr.bf16.mxu0 0
          %1343 = vmatpush1.bf16.msra.mxu0 0
          %1344 = vmatprep.subr.bf16.mxu0 0
          %1345 = vmatpush1.bf16.msra.mxu0 0
          %1346 = vmatprep.subr.bf16.mxu0 0
          %1347 = vmatpush1.bf16.msra.mxu0 0
          %1348 = vmatprep.subr.bf16.mxu0 0
          %1349 = vmatpush1.bf16.msra.mxu0 0
          %1350 = vmatprep.subr.bf16.mxu0 0
          %1351 = vmatpush1.bf16.msra.mxu0 0
          %1352 = vmatprep.subr.bf16.mxu0 0
          %1353 = vmatpush1.bf16.msra.mxu0 0
          %1354 = vmatprep.subr.bf16.mxu0 0
          %1355 = vmatpush1.bf16.msra.mxu0 0
          %1356 = vmatprep.subr.bf16.mxu0 0
          %1357 = vmatpush1.bf16.msra.mxu0 0
          %1358 = vmatprep.subr.bf16.mxu0 0
          %1359 = vmatpush1.bf16.msra.mxu0 0
          %1360 = vmatprep.subr.bf16.mxu0 0
          %1361 = vmatpush1.bf16.msra.mxu0 0
          %1362 = vmatprep.subr.bf16.mxu0 0
          %1363 = vmatpush1.bf16.msra.mxu0 0
          %1364 = vmatprep.subr.bf16.mxu0 0
          %1365 = vmatpush1.bf16.msra.mxu0 0
          %1366 = vmatprep.mubr.bf16.mxu0 0
          %1367 = vmatmul.mubr.bf16.gmra.mrb[0].mxu0 %v1329
          %v1368 = vpop.f32.mrb[0].mxu0
          %v1369 = vadd.f32 0.0, %v1368
          %v1370 = vpop.f32.mrb[0].mxu0
          %v1371 = vadd.f32 0.0, %v1370
          %v1372 = vpop.f32.mrb[0].mxu0
          %v1373 = vadd.f32 0.0, %v1372
          %v1374 = vpop.f32.mrb[0].mxu0
          %v1375 = vadd.f32 0.0, %v1374
          %1376 = vmatprep.mubr.bf16.mxu0 0
          %1377 = vmatmul.mubr.bf16.gmra.mrb[0].mxu0 %v1332
          %v1378 = vpop.f32.mrb[0].mxu0
          %v1379 = vadd.f32 0.0, %v1378
          %v1380 = vpop.f32.mrb[0].mxu0
          %v1381 = vadd.f32 0.0, %v1380
          %v1382 = vpop.f32.mrb[0].mxu0
          %v1383 = vadd.f32 0.0, %v1382
          %v1384 = vpop.f32.mrb[0].mxu0
          %v1385 = vadd.f32 0.0, %v1384
          %1386 = vdwg.mxu0
          %1387 = vmatprep.subr.bf16.mxu0 %v1284
          %1388 = vmatpush1.bf16.msra.mxu0 %v1283
          %1389 = vmatprep.subr.bf16.mxu0 %v1292
          %1390 = vmatpush1.bf16.msra.mxu0 %v1291
          %1391 = vmatprep.subr.bf16.mxu0 %v1300
          %1392 = vmatpush1.bf16.msra.mxu0 %v1299
          %1393 = vmatprep.subr.bf16.mxu0 %v1308
          %1394 = vmatpush1.bf16.msra.mxu0 %v1307
          %1395 = vmatprep.subr.bf16.mxu0 0
          %1396 = vmatpush1.bf16.msra.mxu0 0
          %1397 = vmatprep.subr.bf16.mxu0 0
          %1398 = vmatpush1.bf16.msra.mxu0 0
          %1399 = vmatprep.subr.bf16.mxu0 0
          %1400 = vmatpush1.bf16.msra.mxu0 0
          %1401 = vmatprep.subr.bf16.mxu0 0
          %1402 = vmatpush1.bf16.msra.mxu0 0
          %1403 = vmatprep.subr.bf16.mxu0 0
          %1404 = vmatpush1.bf16.msra.mxu0 0
          %1405 = vmatprep.subr.bf16.mxu0 0
          %1406 = vmatpush1.bf16.msra.mxu0 0
          %1407 = vmatprep.subr.bf16.mxu0 0
          %1408 = vmatpush1.bf16.msra.mxu0 0
          %1409 = vmatprep.subr.bf16.mxu0 0
          %1410 = vmatpush1.bf16.msra.mxu0 0
          %1411 = vmatprep.subr.bf16.mxu0 0
          %1412 = vmatpush1.bf16.msra.mxu0 0
          %1413 = vmatprep.subr.bf16.mxu0 0
          %1414 = vmatpush1.bf16.msra.mxu0 0
          %1415 = vmatprep.subr.bf16.mxu0 0
          %1416 = vmatpush1.bf16.msra.mxu0 0
          %1417 = vmatprep.subr.bf16.mxu0 0
          %1418 = vmatpush1.bf16.msra.mxu0 0
          %1419 = vmatprep.mubr.bf16.mxu0 0
          %1420 = vmatmul.mubr.bf16.gmra.mrb[0].mxu0 %v1329
          %v1421 = vpop.f32.mrb[0].mxu0
          %v1422 = vadd.f32 0.0, %v1421
          %v1423 = vpop.f32.mrb[0].mxu0
          %v1424 = vadd.f32 0.0, %v1423
          %v1425 = vpop.f32.mrb[0].mxu0
          %v1426 = vadd.f32 0.0, %v1425
          %v1427 = vpop.f32.mrb[0].mxu0
          %v1428 = vadd.f32 0.0, %v1427
          %1429 = vmatprep.mubr.bf16.mxu0 0
          %1430 = vmatmul.mubr.bf16.gmra.mrb[0].mxu0 %v1332
          %v1431 = vpop.f32.mrb[0].mxu0
          %v1432 = vadd.f32 0.0, %v1431
          %v1433 = vpop.f32.mrb[0].mxu0
          %v1434 = vadd.f32 0.0, %v1433
          %v1435 = vpop.f32.mrb[0].mxu0
          %v1436 = vadd.f32 0.0, %v1435
          %v1437 = vpop.f32.mrb[0].mxu0
          %v1438 = vadd.f32 0.0, %v1437
          %1439 = vdwg.mxu0
          %1440 = vmatprep.subr.bf16.mxu0 %v1286
          %1441 = vmatpush1.bf16.msra.mxu0 %v1285
          %1442 = vmatprep.subr.bf16.mxu0 %v1294
          %1443 = vmatpush1.bf16.msra.mxu0 %v1293
          %1444 = vmatprep.subr.bf16.mxu0 %v1302
          %1445 = vmatpush1.bf16.msra.mxu0 %v1301
          %1446 = vmatprep.subr.bf16.mxu0 %v1310
          %1447 = vmatpush1.bf16.msra.mxu0 %v1309
          %1448 = vmatprep.subr.bf16.mxu0 0
          %1449 = vmatpush1.bf16.msra.mxu0 0
          %1450 = vmatprep.subr.bf16.mxu0 0
          %1451 = vmatpush1.bf16.msra.mxu0 0
          %1452 = vmatprep.subr.bf16.mxu0 0
          %1453 = vmatpush1.bf16.msra.mxu0 0
          %1454 = vmatprep.subr.bf16.mxu0 0
          %1455 = vmatpush1.bf16.msra.mxu0 0
          %1456 = vmatprep.subr.bf16.mxu0 0
          %1457 = vmatpush1.bf16.msra.mxu0 0
          %1458 = vmatprep.subr.bf16.mxu0 0
          %1459 = vmatpush1.bf16.msra.mxu0 0
          %1460 = vmatprep.subr.bf16.mxu0 0
          %1461 = vmatpush1.bf16.msra.mxu0 0
          %1462 = vmatprep.subr.bf16.mxu0 0
          %1463 = vmatpush1.bf16.msra.mxu0 0
          %1464 = vmatprep.subr.bf16.mxu0 0
          %1465 = vmatpush1.bf16.msra.mxu0 0
          %1466 = vmatprep.subr.bf16.mxu0 0
          %1467 = vmatpush1.bf16.msra.mxu0 0
          %1468 = vmatprep.subr.bf16.mxu0 0
          %1469 = vmatpush1.bf16.msra.mxu0 0
          %1470 = vmatprep.subr.bf16.mxu0 0
          %1471 = vmatpush1.bf16.msra.mxu0 0
          %1472 = vmatprep.mubr.bf16.mxu0 0
          %1473 = vmatmul.mubr.bf16.gmra.mrb[0].mxu0 %v1329
          %v1474 = vpop.f32.mrb[0].mxu0
          %v1475 = vadd.f32 0.0, %v1474
          %v1476 = vpop.f32.mrb[0].mxu0
          %v1477 = vadd.f32 0.0, %v1476
          %v1478 = vpop.f32.mrb[0].mxu0
          %v1479 = vadd.f32 0.0, %v1478
          %v1480 = vpop.f32.mrb[0].mxu0
          %v1481 = vadd.f32 0.0, %v1480
          %1482 = vmatprep.mubr.bf16.mxu0 0
          %1483 = vmatmul.mubr.bf16.gmra.mrb[0].mxu0 %v1332
          %v1484 = vpop.f32.mrb[0].mxu0
          %v1485 = vadd.f32 0.0, %v1484
          %v1486 = vpop.f32.mrb[0].mxu0
          %v1487 = vadd.f32 0.0, %v1486
          %v1488 = vpop.f32.mrb[0].mxu0
          %v1489 = vadd.f32 0.0, %v1488
          %v1490 = vpop.f32.mrb[0].mxu0
          %v1491 = vadd.f32 0.0, %v1490
          %1492 = vdwg.mxu0
          %1493 = vmatprep.subr.bf16.mxu0 %v1288
          %1494 = vmatpush1.bf16.msra.mxu0 %v1287
          %1495 = vmatprep.subr.bf16.mxu0 %v1296
          %1496 = vmatpush1.bf16.msra.mxu0 %v1295
          %1497 = vmatprep.subr.bf16.mxu0 %v1304
          %1498 = vmatpush1.bf16.msra.mxu0 %v1303
          %1499 = vmatprep.subr.bf16.mxu0 %v1312
          %1500 = vmatpush1.bf16.msra.mxu0 %v1311
          %1501 = vmatprep.subr.bf16.mxu0 0
          %1502 = vmatpush1.bf16.msra.mxu0 0
          %1503 = vmatprep.subr.bf16.mxu0 0
          %1504 = vmatpush1.bf16.msra.mxu0 0
          %1505 = vmatprep.subr.bf16.mxu0 0
          %1506 = vmatpush1.bf16.msra.mxu0 0
          %1507 = vmatprep.subr.bf16.mxu0 0
          %1508 = vmatpush1.bf16.msra.mxu0 0
          %1509 = vmatprep.subr.bf16.mxu0 0
          %1510 = vmatpush1.bf16.msra.mxu0 0
          %1511 = vmatprep.subr.bf16.mxu0 0
          %1512 = vmatpush1.bf16.msra.mxu0 0
          %1513 = vmatprep.subr.bf16.mxu0 0
          %1514 = vmatpush1.bf16.msra.mxu0 0
          %1515 = vmatprep.subr.bf16.mxu0 0
          %1516 = vmatpush1.bf16.msra.mxu0 0
          %1517 = vmatprep.subr.bf16.mxu0 0
          %1518 = vmatpush1.bf16.msra.mxu0 0
          %1519 = vmatprep.subr.bf16.mxu0 0
          %1520 = vmatpush1.bf16.msra.mxu0 0
          %1521 = vmatprep.subr.bf16.mxu0 0
          %1522 = vmatpush1.bf16.msra.mxu0 0
          %1523 = vmatprep.subr.bf16.mxu0 0
          %1524 = vmatpush1.bf16.msra.mxu0 0
          %1525 = vmatprep.mubr.bf16.mxu0 0
          %1526 = vmatmul.mubr.bf16.gmra.mrb[0].mxu0 %v1329
          %v1527 = vpop.f32.mrb[0].mxu0
          %v1528 = vadd.f32 0.0, %v1527
          %v1529 = vpop.f32.mrb[0].mxu0
          %v1530 = vadd.f32 0.0, %v1529
          %v1531 = vpop.f32.mrb[0].mxu0
          %v1532 = vadd.f32 0.0, %v1531
          %v1533 = vpop.f32.mrb[0].mxu0
          %v1534 = vadd.f32 0.0, %v1533
          %1535 = vmatprep.mubr.bf16.mxu0 0
          %1536 = vmatmul.mubr.bf16.gmra.mrb[0].mxu0 %v1332
          %v1537 = vpop.f32.mrb[0].mxu0
          %v1538 = vadd.f32 0.0, %v1537
          %v1539 = vpop.f32.mrb[0].mxu0
          %v1540 = vadd.f32 0.0, %v1539
          %v1541 = vpop.f32.mrb[0].mxu0
          %v1542 = vadd.f32 0.0, %v1541
          %v1543 = vpop.f32.mrb[0].mxu0
          %v1544 = vadd.f32 0.0, %v1543
          %1545 = vdwg.mxu0
          %v1546 = vadd.f32 %v1369, %v1371
          %v1547 = vadd.f32 %v1546, %v1422
          %v1548 = vadd.f32 %v1547, %v1424
          %v1549 = vadd.f32 %v1548, %v1475
          %v1550 = vadd.f32 %v1549, %v1477
          %v1551 = vadd.f32 %v1550, %v1528
          %v1552 = vadd.f32 %v1551, %v1530
          %1553 = vadd.xlane.f32.xlu0 %v1552
          %v1554 = vpop.xlane.xlu0 %1553
          %v1555 = vadd.f32 %v1373, %v1375
          %v1556 = vadd.f32 %v1555, %v1426
          %v1557 = vadd.f32 %v1556, %v1428
          %v1558 = vadd.f32 %v1557, %v1479
          %v1559 = vadd.f32 %v1558, %v1481
          %v1560 = vadd.f32 %v1559, %v1532
          %v1561 = vadd.f32 %v1560, %v1534
          %1562 = vadd.xlane.f32.xlu0 %v1561
          %v1563 = vpop.xlane.xlu0 %1562
          %v1564 = vadd.f32 %v1379, %v1381
          %v1565 = vadd.f32 %v1564, %v1432
          %v1566 = vadd.f32 %v1565, %v1434
          %v1567 = vadd.f32 %v1566, %v1485
          %v1568 = vadd.f32 %v1567, %v1487
          %v1569 = vadd.f32 %v1568, %v1538
          %v1570 = vadd.f32 %v1569, %v1540
          %1571 = vadd.xlane.f32.xlu0 %v1570
          %v1572 = vpop.xlane.xlu0 %1571
          %v1573 = vadd.f32 %v1383, %v1385
          %v1574 = vadd.f32 %v1573, %v1436
          %v1575 = vadd.f32 %v1574, %v1438
          %v1576 = vadd.f32 %v1575, %v1489
          %v1577 = vadd.f32 %v1576, %v1491
          %v1578 = vadd.f32 %v1577, %v1542
          %v1579 = vadd.f32 %v1578, %v1544
          %1580 = vadd.xlane.f32.xlu0 %v1579
          %v1581 = vpop.xlane.xlu0 %1580
          %v1582 = vmul.f32 %v1369, %v1369
          %v1583 = vmul.f32 %v1371, %v1371
          %v1584 = vmul.f32 %v1422, %v1422
          %v1585 = vmul.f32 %v1424, %v1424
          %v1586 = vmul.f32 %v1475, %v1475
          %v1587 = vmul.f32 %v1477, %v1477
          %v1588 = vmul.f32 %v1528, %v1528
          %v1589 = vmul.f32 %v1530, %v1530
          %v1590 = vmul.f32 %v1373, %v1373
          %v1591 = vmul.f32 %v1375, %v1375
          %v1592 = vmul.f32 %v1426, %v1426
          %v1593 = vmul.f32 %v1428, %v1428
          %v1594 = vmul.f32 %v1479, %v1479
          %v1595 = vmul.f32 %v1481, %v1481
          %v1596 = vmul.f32 %v1532, %v1532
          %v1597 = vmul.f32 %v1534, %v1534
          %v1598 = vmul.f32 %v1379, %v1379
          %v1599 = vmul.f32 %v1381, %v1381
          %v1600 = vmul.f32 %v1432, %v1432
          %v1601 = vmul.f32 %v1434, %v1434
          %v1602 = vmul.f32 %v1485, %v1485
          %v1603 = vmul.f32 %v1487, %v1487
          %v1604 = vmul.f32 %v1538, %v1538
          %v1605 = vmul.f32 %v1540, %v1540
          %v1606 = vmul.f32 %v1383, %v1383
          %v1607 = vmul.f32 %v1385, %v1385
          %v1608 = vmul.f32 %v1436, %v1436
          %v1609 = vmul.f32 %v1438, %v1438
          %v1610 = vmul.f32 %v1489, %v1489
          %v1611 = vmul.f32 %v1491, %v1491
          %v1612 = vmul.f32 %v1542, %v1542
          %v1613 = vmul.f32 %v1544, %v1544
          %v1614 = vadd.f32 %v1582, %v1583
          %v1615 = vadd.f32 %v1614, %v1584
          %v1616 = vadd.f32 %v1615, %v1585
          %v1617 = vadd.f32 %v1616, %v1586
          %v1618 = vadd.f32 %v1617, %v1587
          %v1619 = vadd.f32 %v1618, %v1588
          %v1620 = vadd.f32 %v1619, %v1589
          %1621 = vadd.xlane.f32.xlu0 %v1620
          %v1622 = vpop.xlane.xlu0 %1621
          %v1623 = vadd.f32 %v1590, %v1591
          %v1624 = vadd.f32 %v1623, %v1592
          %v1625 = vadd.f32 %v1624, %v1593
          %v1626 = vadd.f32 %v1625, %v1594
          %v1627 = vadd.f32 %v1626, %v1595
          %v1628 = vadd.f32 %v1627, %v1596
          %v1629 = vadd.f32 %v1628, %v1597
          %1630 = vadd.xlane.f32.xlu0 %v1629
          %v1631 = vpop.xlane.xlu0 %1630
          %v1632 = vadd.f32 %v1598, %v1599
          %v1633 = vadd.f32 %v1632, %v1600
          %v1634 = vadd.f32 %v1633, %v1601
          %v1635 = vadd.f32 %v1634, %v1602
          %v1636 = vadd.f32 %v1635, %v1603
          %v1637 = vadd.f32 %v1636, %v1604
          %v1638 = vadd.f32 %v1637, %v1605
          %1639 = vadd.xlane.f32.xlu0 %v1638
          %v1640 = vpop.xlane.xlu0 %1639
          %v1641 = vadd.f32 %v1606, %v1607
          %v1642 = vadd.f32 %v1641, %v1608
          %v1643 = vadd.f32 %v1642, %v1609
          %v1644 = vadd.f32 %v1643, %v1610
          %v1645 = vadd.f32 %v1644, %v1611
          %v1646 = vadd.f32 %v1645, %v1612
          %v1647 = vadd.f32 %v1646, %v1613
          %1648 = vadd.xlane.f32.xlu0 %v1647
          %v1649 = vpop.xlane.xlu0 %1648
          %v1650 = vmul.f32 %v1554, 0.0009765625
          %v1651 = vmul.f32 %v1563, 0.0009765625
          %v1652 = vmul.f32 %v1572, 0.0009765625
          %v1653 = vmul.f32 %v1581, 0.0009765625
          %v1654 = vmul.f32 %v1622, 0.0009765625
          %v1655 = vmul.f32 %v1631, 0.0009765625
          %v1656 = vmul.f32 %v1640, 0.0009765625
          %v1657 = vmul.f32 %v1649, 0.0009765625
          %v1658 = vmul.f32 %v1650, %v1650
          %v1659 = vmul.f32 %v1651, %v1651
          %v1660 = vmul.f32 %v1652, %v1652
          %v1661 = vmul.f32 %v1653, %v1653
          %v1662 = vsub.f32 %v1654, %v1658
          %v1663 = vsub.f32 %v1655, %v1659
          %v1664 = vsub.f32 %v1656, %v1660
          %v1665 = vsub.f32 %v1657, %v1661
          %v1666 = vmax.f32 %v1662, 0.0
          %v1667 = vmax.f32 %v1663, 0.0
          %v1668 = vmax.f32 %v1664, 0.0
          %v1669 = vmax.f32 %v1665, 0.0
          %v1670 = vadd.f32 %v1666, 1e-05
          %v1671 = vadd.f32 %v1667, 1e-05
          %v1672 = vadd.f32 %v1668, 1e-05
          %v1673 = vadd.f32 %v1669, 1e-05
          %v1674 = vrsqrt.pop %v1670
          %v1675 = vrsqrt.pop %v1671
          %v1676 = vrsqrt.pop %v1672
          %v1677 = vrsqrt.pop %v1673
          %v1678 = vmul.f32 %v776, %v1674
          %v1679 = vmul.f32 %v777, %v1675
          %v1680 = vmul.f32 %v778, %v1676
          %v1681 = vmul.f32 %v779, %v1677
          %v1682 = vmul.f32 %v1650, %v1678
          %v1683 = vmul.f32 %v1651, %v1679
          %v1684 = vmul.f32 %v1652, %v1680
          %v1685 = vmul.f32 %v1653, %v1681
          %1690 = vrot.lane.b32.xlu0 %v1682, 1
          %v1691 = vpop.permute.xlu0 %1690
          %1692 = vrot.lane.b32.xlu0 %v1683, 1
          %v1693 = vpop.permute.xlu0 %1692
          %1694 = vrot.lane.b32.xlu0 %v1684, 1
          %v1695 = vpop.permute.xlu0 %1694
          %1696 = vrot.lane.b32.xlu0 %v1685, 1
          %v1697 = vpop.permute.xlu0 %1696
          %v1702 = vsub.f32 %v776, %v1691
          %v1703 = vsub.f32 %v777, %v1693
          %v1704 = vsub.f32 %v778, %v1695
          %v1705 = vsub.f32 %v779, %v1697
          %1707 = vset.pattern.permute.xlu0 2
          %1708 = vperm.xlu0 %1707, %v1678
          %v1709 = vpop.permute.xlu0 %1708
          %1712 = vset.pattern.permute.xlu0 2
          %1713 = vperm.xlu0 %1712, %v1679
          %v1714 = vpop.permute.xlu0 %1713
          %1717 = vset.pattern.permute.xlu0 2
          %1718 = vperm.xlu0 %1717, %v1680
          %v1719 = vpop.permute.xlu0 %1718
          %1722 = vset.pattern.permute.xlu0 2
          %1723 = vperm.xlu0 %1722, %v1681
          %v1724 = vpop.permute.xlu0 %1723
          %v1726 = vmul.f32 %v1369, %v1709
          %v1727 = vmul.f32 %v1371, %v1709
          %v1728 = vmul.f32 %v1422, %v1709
          %v1729 = vmul.f32 %v1424, %v1709
          %v1730 = vmul.f32 %v1475, %v1709
          %v1731 = vmul.f32 %v1477, %v1709
          %v1732 = vmul.f32 %v1528, %v1709
          %v1733 = vmul.f32 %v1530, %v1709
          %v1734 = vmul.f32 %v1373, %v1714
          %v1735 = vmul.f32 %v1375, %v1714
          %v1736 = vmul.f32 %v1426, %v1714
          %v1737 = vmul.f32 %v1428, %v1714
          %v1738 = vmul.f32 %v1479, %v1714
          %v1739 = vmul.f32 %v1481, %v1714
          %v1740 = vmul.f32 %v1532, %v1714
          %v1741 = vmul.f32 %v1534, %v1714
          %v1742 = vmul.f32 %v1379, %v1719
          %v1743 = vmul.f32 %v1381, %v1719
          %v1744 = vmul.f32 %v1432, %v1719
          %v1745 = vmul.f32 %v1434, %v1719
          %v1746 = vmul.f32 %v1485, %v1719
          %v1747 = vmul.f32 %v1487, %v1719
          %v1748 = vmul.f32 %v1538, %v1719
          %v1749 = vmul.f32 %v1540, %v1719
          %v1750 = vmul.f32 %v1383, %v1724
          %v1751 = vmul.f32 %v1385, %v1724
          %v1752 = vmul.f32 %v1436, %v1724
          %v1753 = vmul.f32 %v1438, %v1724
          %v1754 = vmul.f32 %v1489, %v1724
          %v1755 = vmul.f32 %v1491, %v1724
          %v1756 = vmul.f32 %v1542, %v1724
          %v1757 = vmul.f32 %v1544, %v1724
          %1759 = vset.pattern.permute.xlu0 3
          %1760 = vperm.xlu0 %1759, %v1702
          %v1761 = vpop.permute.xlu0 %1760
          %1764 = vset.pattern.permute.xlu0 3
          %1765 = vperm.xlu0 %1764, %v1703
          %v1766 = vpop.permute.xlu0 %1765
          %1769 = vset.pattern.permute.xlu0 3
          %1770 = vperm.xlu0 %1769, %v1704
          %v1771 = vpop.permute.xlu0 %1770
          %1774 = vset.pattern.permute.xlu0 3
          %1775 = vperm.xlu0 %1774, %v1705
          %v1776 = vpop.permute.xlu0 %1775
          %v1778 = vadd.f32 %v1726, %v1761
          %v1779 = vadd.f32 %v1727, %v1761
          %v1780 = vadd.f32 %v1728, %v1761
          %v1781 = vadd.f32 %v1729, %v1761
          %v1782 = vadd.f32 %v1730, %v1761
          %v1783 = vadd.f32 %v1731, %v1761
          %v1784 = vadd.f32 %v1732, %v1761
          %v1785 = vadd.f32 %v1733, %v1761
          %v1786 = vadd.f32 %v1734, %v1766
          %v1787 = vadd.f32 %v1735, %v1766
          %v1788 = vadd.f32 %v1736, %v1766
          %v1789 = vadd.f32 %v1737, %v1766
          %v1790 = vadd.f32 %v1738, %v1766
          %v1791 = vadd.f32 %v1739, %v1766
          %v1792 = vadd.f32 %v1740, %v1766
          %v1793 = vadd.f32 %v1741, %v1766
          %v1794 = vadd.f32 %v1742, %v1771
          %v1795 = vadd.f32 %v1743, %v1771
          %v1796 = vadd.f32 %v1744, %v1771
          %v1797 = vadd.f32 %v1745, %v1771
          %v1798 = vadd.f32 %v1746, %v1771
          %v1799 = vadd.f32 %v1747, %v1771
          %v1800 = vadd.f32 %v1748, %v1771
          %v1801 = vadd.f32 %v1749, %v1771
          %v1802 = vadd.f32 %v1750, %v1776
          %v1803 = vadd.f32 %v1751, %v1776
          %v1804 = vadd.f32 %v1752, %v1776
          %v1805 = vadd.f32 %v1753, %v1776
          %v1806 = vadd.f32 %v1754, %v1776
          %v1807 = vadd.f32 %v1755, %v1776
          %v1808 = vadd.f32 %v1756, %v1776
          %v1809 = vadd.f32 %v1757, %v1776
          %v1810 = vmax.f32 %v1778, 0.0
          %v1811 = vmax.f32 %v1779, 0.0
          %v1812 = vmax.f32 %v1780, 0.0
          %v1813 = vmax.f32 %v1781, 0.0
          %v1814 = vmax.f32 %v1782, 0.0
          %v1815 = vmax.f32 %v1783, 0.0
          %v1816 = vmax.f32 %v1784, 0.0
          %v1817 = vmax.f32 %v1785, 0.0
          %v1818 = vmax.f32 %v1786, 0.0
          %v1819 = vmax.f32 %v1787, 0.0
          %v1820 = vmax.f32 %v1788, 0.0
          %v1821 = vmax.f32 %v1789, 0.0
          %v1822 = vmax.f32 %v1790, 0.0
          %v1823 = vmax.f32 %v1791, 0.0
          %v1824 = vmax.f32 %v1792, 0.0
          %v1825 = vmax.f32 %v1793, 0.0
          %v1826 = vmax.f32 %v1794, 0.0
          %v1827 = vmax.f32 %v1795, 0.0
          %v1828 = vmax.f32 %v1796, 0.0
          %v1829 = vmax.f32 %v1797, 0.0
          %v1830 = vmax.f32 %v1798, 0.0
          %v1831 = vmax.f32 %v1799, 0.0
          %v1832 = vmax.f32 %v1800, 0.0
          %v1833 = vmax.f32 %v1801, 0.0
          %v1834 = vmax.f32 %v1802, 0.0
          %v1835 = vmax.f32 %v1803, 0.0
          %v1836 = vmax.f32 %v1804, 0.0
          %v1837 = vmax.f32 %v1805, 0.0
          %v1838 = vmax.f32 %v1806, 0.0
          %v1839 = vmax.f32 %v1807, 0.0
          %v1840 = vmax.f32 %v1808, 0.0
          %v1841 = vmax.f32 %v1809, 0.0
          %v1842 = vpack.c.bf16 %v1818, %v1810
          %v1843 = vpack.c.bf16 %v1819, %v1811
          %v1844 = vpack.c.bf16 %v1820, %v1812
          %v1845 = vpack.c.bf16 %v1821, %v1813
          %v1846 = vpack.c.bf16 %v1822, %v1814
          %v1847 = vpack.c.bf16 %v1823, %v1815
          %v1848 = vpack.c.bf16 %v1824, %v1816
          %v1849 = vpack.c.bf16 %v1825, %v1817
          %v1850 = vpack.c.bf16 %v1834, %v1826
          %v1851 = vpack.c.bf16 %v1835, %v1827
          %v1852 = vpack.c.bf16 %v1836, %v1828
          %v1853 = vpack.c.bf16 %v1837, %v1829
          %v1854 = vpack.c.bf16 %v1838, %v1830
          %v1855 = vpack.c.bf16 %v1839, %v1831
          %v1856 = vpack.c.bf16 %v1840, %v1832
          %v1857 = vpack.c.bf16 %v1841, %v1833
          %v1858 = vld [vmem:[%s1 + $0x30] sm:$0xf]
          %v1859 = vld [vmem:[%s1 + $0x34] sm:$0xf]
          %v1862 = vunpack.c.l.b16 %v1858
          %v1863 = vunpack.c.l.b16 %v1859
          %v1864 = vpack.c.b16 %v1863, %v1862
          %vm1865 = vcmask 261120
          %v1867 = vsel %vm1865, %v1864, 0
          %1869 = vmatprep.subr.bf16.mxu0 %v1843
          %1870 = vmatpush1.bf16.msra.mxu0 %v1842
          %1871 = vmatprep.subr.bf16.mxu0 %v1851
          %1872 = vmatpush1.bf16.msra.mxu0 %v1850
          %1873 = vmatprep.subr.bf16.mxu0 0
          %1874 = vmatpush1.bf16.msra.mxu0 0
          %1875 = vmatprep.subr.bf16.mxu0 0
          %1876 = vmatpush1.bf16.msra.mxu0 0
          %1877 = vmatprep.subr.bf16.mxu0 0
          %1878 = vmatpush1.bf16.msra.mxu0 0
          %1879 = vmatprep.subr.bf16.mxu0 0
          %1880 = vmatpush1.bf16.msra.mxu0 0
          %1881 = vmatprep.subr.bf16.mxu0 0
          %1882 = vmatpush1.bf16.msra.mxu0 0
          %1883 = vmatprep.subr.bf16.mxu0 0
          %1884 = vmatpush1.bf16.msra.mxu0 0
          %1885 = vmatprep.subr.bf16.mxu0 0
          %1886 = vmatpush1.bf16.msra.mxu0 0
          %1887 = vmatprep.subr.bf16.mxu0 0
          %1888 = vmatpush1.bf16.msra.mxu0 0
          %1889 = vmatprep.subr.bf16.mxu0 0
          %1890 = vmatpush1.bf16.msra.mxu0 0
          %1891 = vmatprep.subr.bf16.mxu0 0
          %1892 = vmatpush1.bf16.msra.mxu0 0
          %1893 = vmatprep.subr.bf16.mxu0 0
          %1894 = vmatpush1.bf16.msra.mxu0 0
          %1895 = vmatprep.subr.bf16.mxu0 0
          %1896 = vmatpush1.bf16.msra.mxu0 0
          %1897 = vmatprep.subr.bf16.mxu0 0
          %1898 = vmatpush1.bf16.msra.mxu0 0
          %1899 = vmatprep.subr.bf16.mxu0 0
          %1900 = vmatpush1.bf16.msra.mxu0 0
          %1901 = vmatprep.mubr.bf16.mxu0 0
          %1902 = vmatmul.mubr.bf16.gmra.mrb[0].mxu0 %v1867
          %v1903 = vpop.f32.mrb[0].mxu0
          %v1904 = vadd.f32 0.0, %v1903
          %v1905 = vpop.f32.mrb[0].mxu0
          %v1906 = vadd.f32 0.0, %v1905
          %v1907 = vpop.f32.mrb[0].mxu0
          %v1908 = vadd.f32 0.0, %v1907
          %v1909 = vpop.f32.mrb[0].mxu0
          %v1910 = vadd.f32 0.0, %v1909
          %1911 = vdwg.mxu0
          %1912 = vmatprep.subr.bf16.mxu0 %v1845
          %1913 = vmatpush1.bf16.msra.mxu0 %v1844
          %1914 = vmatprep.subr.bf16.mxu0 %v1853
          %1915 = vmatpush1.bf16.msra.mxu0 %v1852
          %1916 = vmatprep.subr.bf16.mxu0 0
          %1917 = vmatpush1.bf16.msra.mxu0 0
          %1918 = vmatprep.subr.bf16.mxu0 0
          %1919 = vmatpush1.bf16.msra.mxu0 0
          %1920 = vmatprep.subr.bf16.mxu0 0
          %1921 = vmatpush1.bf16.msra.mxu0 0
          %1922 = vmatprep.subr.bf16.mxu0 0
          %1923 = vmatpush1.bf16.msra.mxu0 0
          %1924 = vmatprep.subr.bf16.mxu0 0
          %1925 = vmatpush1.bf16.msra.mxu0 0
          %1926 = vmatprep.subr.bf16.mxu0 0
          %1927 = vmatpush1.bf16.msra.mxu0 0
          %1928 = vmatprep.subr.bf16.mxu0 0
          %1929 = vmatpush1.bf16.msra.mxu0 0
          %1930 = vmatprep.subr.bf16.mxu0 0
          %1931 = vmatpush1.bf16.msra.mxu0 0
          %1932 = vmatprep.subr.bf16.mxu0 0
          %1933 = vmatpush1.bf16.msra.mxu0 0
          %1934 = vmatprep.subr.bf16.mxu0 0
          %1935 = vmatpush1.bf16.msra.mxu0 0
          %1936 = vmatprep.subr.bf16.mxu0 0
          %1937 = vmatpush1.bf16.msra.mxu0 0
          %1938 = vmatprep.subr.bf16.mxu0 0
          %1939 = vmatpush1.bf16.msra.mxu0 0
          %1940 = vmatprep.subr.bf16.mxu0 0
          %1941 = vmatpush1.bf16.msra.mxu0 0
          %1942 = vmatprep.subr.bf16.mxu0 0
          %1943 = vmatpush1.bf16.msra.mxu0 0
          %1944 = vmatprep.mubr.bf16.mxu0 0
          %1945 = vmatmul.mubr.bf16.gmra.mrb[0].mxu0 %v1867
          %v1946 = vpop.f32.mrb[0].mxu0
          %v1947 = vadd.f32 0.0, %v1946
          %v1948 = vpop.f32.mrb[0].mxu0
          %v1949 = vadd.f32 0.0, %v1948
          %v1950 = vpop.f32.mrb[0].mxu0
          %v1951 = vadd.f32 0.0, %v1950
          %v1952 = vpop.f32.mrb[0].mxu0
          %v1953 = vadd.f32 0.0, %v1952
          %1954 = vdwg.mxu0
          %1955 = vmatprep.subr.bf16.mxu0 %v1847
          %1956 = vmatpush1.bf16.msra.mxu0 %v1846
          %1957 = vmatprep.subr.bf16.mxu0 %v1855
          %1958 = vmatpush1.bf16.msra.mxu0 %v1854
          %1959 = vmatprep.subr.bf16.mxu0 0
          %1960 = vmatpush1.bf16.msra.mxu0 0
          %1961 = vmatprep.subr.bf16.mxu0 0
          %1962 = vmatpush1.bf16.msra.mxu0 0
          %1963 = vmatprep.subr.bf16.mxu0 0
          %1964 = vmatpush1.bf16.msra.mxu0 0
          %1965 = vmatprep.subr.bf16.mxu0 0
          %1966 = vmatpush1.bf16.msra.mxu0 0
          %1967 = vmatprep.subr.bf16.mxu0 0
          %1968 = vmatpush1.bf16.msra.mxu0 0
          %1969 = vmatprep.subr.bf16.mxu0 0
          %1970 = vmatpush1.bf16.msra.mxu0 0
          %1971 = vmatprep.subr.bf16.mxu0 0
          %1972 = vmatpush1.bf16.msra.mxu0 0
          %1973 = vmatprep.subr.bf16.mxu0 0
          %1974 = vmatpush1.bf16.msra.mxu0 0
          %1975 = vmatprep.subr.bf16.mxu0 0
          %1976 = vmatpush1.bf16.msra.mxu0 0
          %1977 = vmatprep.subr.bf16.mxu0 0
          %1978 = vmatpush1.bf16.msra.mxu0 0
          %1979 = vmatprep.subr.bf16.mxu0 0
          %1980 = vmatpush1.bf16.msra.mxu0 0
          %1981 = vmatprep.subr.bf16.mxu0 0
          %1982 = vmatpush1.bf16.msra.mxu0 0
          %1983 = vmatprep.subr.bf16.mxu0 0
          %1984 = vmatpush1.bf16.msra.mxu0 0
          %1985 = vmatprep.subr.bf16.mxu0 0
          %1986 = vmatpush1.bf16.msra.mxu0 0
          %1987 = vmatprep.mubr.bf16.mxu0 0
          %1988 = vmatmul.mubr.bf16.gmra.mrb[0].mxu0 %v1867
          %v1989 = vpop.f32.mrb[0].mxu0
          %v1990 = vadd.f32 0.0, %v1989
          %v1991 = vpop.f32.mrb[0].mxu0
          %v1992 = vadd.f32 0.0, %v1991
          %v1993 = vpop.f32.mrb[0].mxu0
          %v1994 = vadd.f32 0.0, %v1993
          %v1995 = vpop.f32.mrb[0].mxu0
          %v1996 = vadd.f32 0.0, %v1995
          %1997 = vdwg.mxu0
          %1998 = vmatprep.subr.bf16.mxu0 %v1849
          %1999 = vmatpush1.bf16.msra.mxu0 %v1848
          %2000 = vmatprep.subr.bf16.mxu0 %v1857
          %2001 = vmatpush1.bf16.msra.mxu0 %v1856
          %2002 = vmatprep.subr.bf16.mxu0 0
          %2003 = vmatpush1.bf16.msra.mxu0 0
          %2004 = vmatprep.subr.bf16.mxu0 0
          %2005 = vmatpush1.bf16.msra.mxu0 0
          %2006 = vmatprep.subr.bf16.mxu0 0
          %2007 = vmatpush1.bf16.msra.mxu0 0
          %2008 = vmatprep.subr.bf16.mxu0 0
          %2009 = vmatpush1.bf16.msra.mxu0 0
          %2010 = vmatprep.subr.bf16.mxu0 0
          %2011 = vmatpush1.bf16.msra.mxu0 0
          %2012 = vmatprep.subr.bf16.mxu0 0
          %2013 = vmatpush1.bf16.msra.mxu0 0
          %2014 = vmatprep.subr.bf16.mxu0 0
          %2015 = vmatpush1.bf16.msra.mxu0 0
          %2016 = vmatprep.subr.bf16.mxu0 0
          %2017 = vmatpush1.bf16.msra.mxu0 0
          %2018 = vmatprep.subr.bf16.mxu0 0
          %2019 = vmatpush1.bf16.msra.mxu0 0
          %2020 = vmatprep.subr.bf16.mxu0 0
          %2021 = vmatpush1.bf16.msra.mxu0 0
          %2022 = vmatprep.subr.bf16.mxu0 0
          %2023 = vmatpush1.bf16.msra.mxu0 0
          %2024 = vmatprep.subr.bf16.mxu0 0
          %2025 = vmatpush1.bf16.msra.mxu0 0
          %2026 = vmatprep.subr.bf16.mxu0 0
          %2027 = vmatpush1.bf16.msra.mxu0 0
          %2028 = vmatprep.subr.bf16.mxu0 0
          %2029 = vmatpush1.bf16.msra.mxu0 0
          %2030 = vmatprep.mubr.bf16.mxu0 0
          %2031 = vmatmul.mubr.bf16.gmra.mrb[0].mxu0 %v1867
          %v2032 = vpop.f32.mrb[0].mxu0
          %v2033 = vadd.f32 0.0, %v2032
          %v2034 = vpop.f32.mrb[0].mxu0
          %v2035 = vadd.f32 0.0, %v2034
          %v2036 = vpop.f32.mrb[0].mxu0
          %v2037 = vadd.f32 0.0, %v2036
          %v2038 = vpop.f32.mrb[0].mxu0
          %v2039 = vadd.f32 0.0, %v2038
          %2040 = vdwg.mxu0
          %v2041 = vadd.f32 %v1904, %v1906
          %v2042 = vadd.f32 %v2041, %v1947
          %v2043 = vadd.f32 %v2042, %v1949
          %v2044 = vadd.f32 %v2043, %v1990
          %v2045 = vadd.f32 %v2044, %v1992
          %v2046 = vadd.f32 %v2045, %v2033
          %v2047 = vadd.f32 %v2046, %v2035
          %2048 = vadd.xlane.f32.xlu0 %v2047
          %v2049 = vpop.xlane.xlu0 %2048
          %v2050 = vadd.f32 %v1908, %v1910
          %v2051 = vadd.f32 %v2050, %v1951
          %v2052 = vadd.f32 %v2051, %v1953
          %v2053 = vadd.f32 %v2052, %v1994
          %v2054 = vadd.f32 %v2053, %v1996
          %v2055 = vadd.f32 %v2054, %v2037
          %v2056 = vadd.f32 %v2055, %v2039
          %2057 = vadd.xlane.f32.xlu0 %v2056
          %v2058 = vpop.xlane.xlu0 %2057
          %v2059 = vmul.f32 %v1904, %v1904
          %v2060 = vmul.f32 %v1906, %v1906
          %v2061 = vmul.f32 %v1947, %v1947
          %v2062 = vmul.f32 %v1949, %v1949
          %v2063 = vmul.f32 %v1990, %v1990
          %v2064 = vmul.f32 %v1992, %v1992
          %v2065 = vmul.f32 %v2033, %v2033
          %v2066 = vmul.f32 %v2035, %v2035
          %v2067 = vmul.f32 %v1908, %v1908
          %v2068 = vmul.f32 %v1910, %v1910
          %v2069 = vmul.f32 %v1951, %v1951
          %v2070 = vmul.f32 %v1953, %v1953
          %v2071 = vmul.f32 %v1994, %v1994
          %v2072 = vmul.f32 %v1996, %v1996
          %v2073 = vmul.f32 %v2037, %v2037
          %v2074 = vmul.f32 %v2039, %v2039
          %v2075 = vadd.f32 %v2059, %v2060
          %v2076 = vadd.f32 %v2075, %v2061
          %v2077 = vadd.f32 %v2076, %v2062
          %v2078 = vadd.f32 %v2077, %v2063
          %v2079 = vadd.f32 %v2078, %v2064
          %v2080 = vadd.f32 %v2079, %v2065
          %v2081 = vadd.f32 %v2080, %v2066
          %2082 = vadd.xlane.f32.xlu0 %v2081
          %v2083 = vpop.xlane.xlu0 %2082
          %v2084 = vadd.f32 %v2067, %v2068
          %v2085 = vadd.f32 %v2084, %v2069
          %v2086 = vadd.f32 %v2085, %v2070
          %v2087 = vadd.f32 %v2086, %v2071
          %v2088 = vadd.f32 %v2087, %v2072
          %v2089 = vadd.f32 %v2088, %v2073
          %v2090 = vadd.f32 %v2089, %v2074
          %2091 = vadd.xlane.f32.xlu0 %v2090
          %v2092 = vpop.xlane.xlu0 %2091
          %v2093 = vmul.f32 %v2049, 0.0009765625
          %v2094 = vmul.f32 %v2058, 0.0009765625
          %v2095 = vmul.f32 %v2083, 0.0009765625
          %v2096 = vmul.f32 %v2092, 0.0009765625
          %v2097 = vmul.f32 %v2093, %v2093
          %v2098 = vmul.f32 %v2094, %v2094
          %v2099 = vsub.f32 %v2095, %v2097
          %v2100 = vsub.f32 %v2096, %v2098
          %v2101 = vmax.f32 %v2099, 0.0
          %v2102 = vmax.f32 %v2100, 0.0
          %v2103 = vadd.f32 %v2101, 1e-05
          %v2104 = vadd.f32 %v2102, 1e-05
          %v2105 = vrsqrt.pop %v2103
          %v2106 = vrsqrt.pop %v2104
          %v2107 = vmul.f32 %v776, %v2105
          %v2108 = vmul.f32 %v777, %v2106
          %v2109 = vmul.f32 %v2093, %v2107
          %v2110 = vmul.f32 %v2094, %v2108
          %2113 = vrot.lane.b32.xlu0 %v2109, 1
          %v2114 = vpop.permute.xlu0 %2113
          %2115 = vrot.lane.b32.xlu0 %v2110, 1
          %v2116 = vpop.permute.xlu0 %2115
          %v2119 = vsub.f32 %v776, %v2114
          %v2120 = vsub.f32 %v777, %v2116
          %2122 = vset.pattern.permute.xlu0 4
          %2123 = vperm.xlu0 %2122, %v2107
          %v2124 = vpop.permute.xlu0 %2123
          %2127 = vset.pattern.permute.xlu0 4
          %2128 = vperm.xlu0 %2127, %v2108
          %v2129 = vpop.permute.xlu0 %2128
          %v2131 = vmul.f32 %v1904, %v2124
          %v2132 = vmul.f32 %v1906, %v2124
          %v2133 = vmul.f32 %v1947, %v2124
          %v2134 = vmul.f32 %v1949, %v2124
          %v2135 = vmul.f32 %v1990, %v2124
          %v2136 = vmul.f32 %v1992, %v2124
          %v2137 = vmul.f32 %v2033, %v2124
          %v2138 = vmul.f32 %v2035, %v2124
          %v2139 = vmul.f32 %v1908, %v2129
          %v2140 = vmul.f32 %v1910, %v2129
          %v2141 = vmul.f32 %v1951, %v2129
          %v2142 = vmul.f32 %v1953, %v2129
          %v2143 = vmul.f32 %v1994, %v2129
          %v2144 = vmul.f32 %v1996, %v2129
          %v2145 = vmul.f32 %v2037, %v2129
          %v2146 = vmul.f32 %v2039, %v2129
          %2148 = vset.pattern.permute.xlu0 5
          %2149 = vperm.xlu0 %2148, %v2119
          %v2150 = vpop.permute.xlu0 %2149
          %2153 = vset.pattern.permute.xlu0 5
          %2154 = vperm.xlu0 %2153, %v2120
          %v2155 = vpop.permute.xlu0 %2154
          %v2157 = vadd.f32 %v2131, %v2150
          %v2158 = vadd.f32 %v2132, %v2150
          %v2159 = vadd.f32 %v2133, %v2150
          %v2160 = vadd.f32 %v2134, %v2150
          %v2161 = vadd.f32 %v2135, %v2150
          %v2162 = vadd.f32 %v2136, %v2150
          %v2163 = vadd.f32 %v2137, %v2150
          %v2164 = vadd.f32 %v2138, %v2150
          %v2165 = vadd.f32 %v2139, %v2155
          %v2166 = vadd.f32 %v2140, %v2155
          %v2167 = vadd.f32 %v2141, %v2155
          %v2168 = vadd.f32 %v2142, %v2155
          %v2169 = vadd.f32 %v2143, %v2155
          %v2170 = vadd.f32 %v2144, %v2155
          %v2171 = vadd.f32 %v2145, %v2155
          %v2172 = vadd.f32 %v2146, %v2155
          %v2173 = vmax.f32 %v2157, 0.0
          %v2174 = vmax.f32 %v2158, 0.0
          %v2175 = vmax.f32 %v2159, 0.0
          %v2176 = vmax.f32 %v2160, 0.0
          %v2177 = vmax.f32 %v2161, 0.0
          %v2178 = vmax.f32 %v2162, 0.0
          %v2179 = vmax.f32 %v2163, 0.0
          %v2180 = vmax.f32 %v2164, 0.0
          %v2181 = vmax.f32 %v2165, 0.0
          %v2182 = vmax.f32 %v2166, 0.0
          %v2183 = vmax.f32 %v2167, 0.0
          %v2184 = vmax.f32 %v2168, 0.0
          %v2185 = vmax.f32 %v2169, 0.0
          %v2186 = vmax.f32 %v2170, 0.0
          %v2187 = vmax.f32 %v2171, 0.0
          %v2188 = vmax.f32 %v2172, 0.0
          %v2189 = vpack.c.bf16 %v2181, %v2173
          %v2190 = vpack.c.bf16 %v2182, %v2174
          %v2191 = vpack.c.bf16 %v2183, %v2175
          %v2192 = vpack.c.bf16 %v2184, %v2176
          %v2193 = vpack.c.bf16 %v2185, %v2177
          %v2194 = vpack.c.bf16 %v2186, %v2178
          %v2195 = vpack.c.bf16 %v2187, %v2179
          %v2196 = vpack.c.bf16 %v2188, %v2180
          %v2197 = vld [vmem:[%s1 + $0x38] sm:$0x3]
          %2199 = vset.pattern.permute.xlu0 6
          %2200 = vperm.xlu0 %2199, %v784
          %v2201 = vpop.permute.xlu0 %2200
          %vm2203 = vcmask 130048
          %v2205 = vsel %vm2203, %v2197, 0
          %2207 = vmatprep.subr.bf16.mxu0 %v2190
          %2208 = vmatpush1.bf16.msra.mxu0 %v2189
          %2209 = vmatprep.subr.bf16.mxu0 0
          %2210 = vmatpush1.bf16.msra.mxu0 0
          %2211 = vmatprep.subr.bf16.mxu0 0
          %2212 = vmatpush1.bf16.msra.mxu0 0
          %2213 = vmatprep.subr.bf16.mxu0 0
          %2214 = vmatpush1.bf16.msra.mxu0 0
          %2215 = vmatprep.subr.bf16.mxu0 0
          %2216 = vmatpush1.bf16.msra.mxu0 0
          %2217 = vmatprep.subr.bf16.mxu0 0
          %2218 = vmatpush1.bf16.msra.mxu0 0
          %2219 = vmatprep.subr.bf16.mxu0 0
          %2220 = vmatpush1.bf16.msra.mxu0 0
          %2221 = vmatprep.subr.bf16.mxu0 0
          %2222 = vmatpush1.bf16.msra.mxu0 0
          %2223 = vmatprep.subr.bf16.mxu0 0
          %2224 = vmatpush1.bf16.msra.mxu0 0
          %2225 = vmatprep.subr.bf16.mxu0 0
          %2226 = vmatpush1.bf16.msra.mxu0 0
          %2227 = vmatprep.subr.bf16.mxu0 0
          %2228 = vmatpush1.bf16.msra.mxu0 0
          %2229 = vmatprep.subr.bf16.mxu0 0
          %2230 = vmatpush1.bf16.msra.mxu0 0
          %2231 = vmatprep.subr.bf16.mxu0 0
          %2232 = vmatpush1.bf16.msra.mxu0 0
          %2233 = vmatprep.subr.bf16.mxu0 0
          %2234 = vmatpush1.bf16.msra.mxu0 0
          %2235 = vmatprep.subr.bf16.mxu0 0
          %2236 = vmatpush1.bf16.msra.mxu0 0
          %2237 = vmatprep.subr.bf16.mxu0 0
          %2238 = vmatpush1.bf16.msra.mxu0 0
          %2239 = vmatprep.mubr.bf16.mxu0 0
          %2240 = vmatmul.mubr.bf16.gmra.mrb[0].mxu0 %v2205
          %v2241 = vpop.f32.mrb[0].mxu0
          %v2242 = vadd.f32 %v2201, %v2241
          %v2243 = vpop.f32.mrb[0].mxu0
          %v2244 = vadd.f32 %v2201, %v2243
          %v2245 = vpop.f32.mrb[0].mxu0
          %v2246 = vpop.f32.mrb[0].mxu0
          %2247 = vdwg.mxu0
          %2248 = vmatprep.subr.bf16.mxu0 %v2192
          %2249 = vmatpush1.bf16.msra.mxu0 %v2191
          %2250 = vmatprep.subr.bf16.mxu0 0
          %2251 = vmatpush1.bf16.msra.mxu0 0
          %2252 = vmatprep.subr.bf16.mxu0 0
          %2253 = vmatpush1.bf16.msra.mxu0 0
          %2254 = vmatprep.subr.bf16.mxu0 0
          %2255 = vmatpush1.bf16.msra.mxu0 0
          %2256 = vmatprep.subr.bf16.mxu0 0
          %2257 = vmatpush1.bf16.msra.mxu0 0
          %2258 = vmatprep.subr.bf16.mxu0 0
          %2259 = vmatpush1.bf16.msra.mxu0 0
          %2260 = vmatprep.subr.bf16.mxu0 0
          %2261 = vmatpush1.bf16.msra.mxu0 0
          %2262 = vmatprep.subr.bf16.mxu0 0
          %2263 = vmatpush1.bf16.msra.mxu0 0
          %2264 = vmatprep.subr.bf16.mxu0 0
          %2265 = vmatpush1.bf16.msra.mxu0 0
          %2266 = vmatprep.subr.bf16.mxu0 0
          %2267 = vmatpush1.bf16.msra.mxu0 0
          %2268 = vmatprep.subr.bf16.mxu0 0
          %2269 = vmatpush1.bf16.msra.mxu0 0
          %2270 = vmatprep.subr.bf16.mxu0 0
          %2271 = vmatpush1.bf16.msra.mxu0 0
          %2272 = vmatprep.subr.bf16.mxu0 0
          %2273 = vmatpush1.bf16.msra.mxu0 0
          %2274 = vmatprep.subr.bf16.mxu0 0
          %2275 = vmatpush1.bf16.msra.mxu0 0
          %2276 = vmatprep.subr.bf16.mxu0 0
          %2277 = vmatpush1.bf16.msra.mxu0 0
          %2278 = vmatprep.subr.bf16.mxu0 0
          %2279 = vmatpush1.bf16.msra.mxu0 0
          %2280 = vmatprep.mubr.bf16.mxu0 0
          %2281 = vmatmul.mubr.bf16.gmra.mrb[0].mxu0 %v2205
          %v2282 = vpop.f32.mrb[0].mxu0
          %v2283 = vadd.f32 %v2201, %v2282
          %v2284 = vpop.f32.mrb[0].mxu0
          %v2285 = vadd.f32 %v2201, %v2284
          %v2286 = vpop.f32.mrb[0].mxu0
          %v2287 = vpop.f32.mrb[0].mxu0
          %2288 = vdwg.mxu0
          %2289 = vmatprep.subr.bf16.mxu0 %v2194
          %2290 = vmatpush1.bf16.msra.mxu0 %v2193
          %2291 = vmatprep.subr.bf16.mxu0 0
          %2292 = vmatpush1.bf16.msra.mxu0 0
          %2293 = vmatprep.subr.bf16.mxu0 0
          %2294 = vmatpush1.bf16.msra.mxu0 0
          %2295 = vmatprep.subr.bf16.mxu0 0
          %2296 = vmatpush1.bf16.msra.mxu0 0
          %2297 = vmatprep.subr.bf16.mxu0 0
          %2298 = vmatpush1.bf16.msra.mxu0 0
          %2299 = vmatprep.subr.bf16.mxu0 0
          %2300 = vmatpush1.bf16.msra.mxu0 0
          %2301 = vmatprep.subr.bf16.mxu0 0
          %2302 = vmatpush1.bf16.msra.mxu0 0
          %2303 = vmatprep.subr.bf16.mxu0 0
          %2304 = vmatpush1.bf16.msra.mxu0 0
          %2305 = vmatprep.subr.bf16.mxu0 0
          %2306 = vmatpush1.bf16.msra.mxu0 0
          %2307 = vmatprep.subr.bf16.mxu0 0
          %2308 = vmatpush1.bf16.msra.mxu0 0
          %2309 = vmatprep.subr.bf16.mxu0 0
          %2310 = vmatpush1.bf16.msra.mxu0 0
          %2311 = vmatprep.subr.bf16.mxu0 0
          %2312 = vmatpush1.bf16.msra.mxu0 0
          %2313 = vmatprep.subr.bf16.mxu0 0
          %2314 = vmatpush1.bf16.msra.mxu0 0
          %2315 = vmatprep.subr.bf16.mxu0 0
          %2316 = vmatpush1.bf16.msra.mxu0 0
          %2317 = vmatprep.subr.bf16.mxu0 0
          %2318 = vmatpush1.bf16.msra.mxu0 0
          %2319 = vmatprep.subr.bf16.mxu0 0
          %2320 = vmatpush1.bf16.msra.mxu0 0
          %2321 = vmatprep.mubr.bf16.mxu0 0
          %2322 = vmatmul.mubr.bf16.gmra.mrb[0].mxu0 %v2205
          %v2323 = vpop.f32.mrb[0].mxu0
          %v2324 = vadd.f32 %v2201, %v2323
          %v2325 = vpop.f32.mrb[0].mxu0
          %v2326 = vadd.f32 %v2201, %v2325
          %v2327 = vpop.f32.mrb[0].mxu0
          %v2328 = vpop.f32.mrb[0].mxu0
          %2329 = vdwg.mxu0
          %2330 = vmatprep.subr.bf16.mxu0 %v2196
          %2331 = vmatpush1.bf16.msra.mxu0 %v2195
          %2332 = vmatprep.subr.bf16.mxu0 0
          %2333 = vmatpush1.bf16.msra.mxu0 0
          %2334 = vmatprep.subr.bf16.mxu0 0
          %2335 = vmatpush1.bf16.msra.mxu0 0
          %2336 = vmatprep.subr.bf16.mxu0 0
          %2337 = vmatpush1.bf16.msra.mxu0 0
          %2338 = vmatprep.subr.bf16.mxu0 0
          %2339 = vmatpush1.bf16.msra.mxu0 0
          %2340 = vmatprep.subr.bf16.mxu0 0
          %2341 = vmatpush1.bf16.msra.mxu0 0
          %2342 = vmatprep.subr.bf16.mxu0 0
          %2343 = vmatpush1.bf16.msra.mxu0 0
          %2344 = vmatprep.subr.bf16.mxu0 0
          %2345 = vmatpush1.bf16.msra.mxu0 0
          %2346 = vmatprep.subr.bf16.mxu0 0
          %2347 = vmatpush1.bf16.msra.mxu0 0
          %2348 = vmatprep.subr.bf16.mxu0 0
          %2349 = vmatpush1.bf16.msra.mxu0 0
          %2350 = vmatprep.subr.bf16.mxu0 0
          %2351 = vmatpush1.bf16.msra.mxu0 0
          %2352 = vmatprep.subr.bf16.mxu0 0
          %2353 = vmatpush1.bf16.msra.mxu0 0
          %2354 = vmatprep.subr.bf16.mxu0 0
          %2355 = vmatpush1.bf16.msra.mxu0 0
          %2356 = vmatprep.subr.bf16.mxu0 0
          %2357 = vmatpush1.bf16.msra.mxu0 0
          %2358 = vmatprep.subr.bf16.mxu0 0
          %2359 = vmatpush1.bf16.msra.mxu0 0
          %2360 = vmatprep.subr.bf16.mxu0 0
          %2361 = vmatpush1.bf16.msra.mxu0 0
          %2362 = vmatprep.mubr.bf16.mxu0 0
          %2363 = vmatmul.mubr.bf16.gmra.mrb[0].mxu0 %v2205
          %v2364 = vpop.f32.mrb[0].mxu0
          %v2365 = vadd.f32 %v2201, %v2364
          %v2366 = vpop.f32.mrb[0].mxu0
          %v2367 = vadd.f32 %v2201, %v2366
          %v2368 = vpop.f32.mrb[0].mxu0
          %v2369 = vpop.f32.mrb[0].mxu0
          %2370 = vdwg.mxu0
          %v2371 = vmax.f32 %v2242, 0.0
          %v2372 = vmax.f32 %v2244, 0.0
          %v2373 = vmax.f32 %v2283, 0.0
          %v2374 = vmax.f32 %v2285, 0.0
          %v2375 = vmax.f32 %v2324, 0.0
          %v2376 = vmax.f32 %v2326, 0.0
          %v2377 = vmax.f32 %v2365, 0.0
          %v2378 = vmax.f32 %v2367, 0.0
          %v2387 = vcombine.low %v2371, %v2372
          %v2388 = vcombine.low %v2373, %v2374
          %v2389 = vcombine.low %v2375, %v2376
          %v2390 = vcombine.low %v2377, %v2378
          %2395 = vst [vmem:[#allocation5] sm:$0xff] %v2387
          %2396 = vst [vmem:[#allocation5 + $0x8] sm:$0xff] %v2388
          %2397 = vst [vmem:[#allocation5 + $0x10] sm:$0xff] %v2389
          %2398 = vst [vmem:[#allocation5 + $0x18] sm:$0xff] %v2390
        $region44: #{congestion_forward.1} parent=31 // pred_fallthru
          _
        // Predicated region
        $region45: #{congestion_forward.1} parent=31 // pred_check
          %p2399 = pneg %p96
        $region46: #{congestion_forward.1} parent=31 // pred_check_branch
          %2401 = sbr.rel (%p2399) target = $region48
        $region47: #{congestion_forward.1} parent=31 // pred_region
          %s2403 = ssub.s32 512, 512
          %2404 = vsyncadd [#allocation6], %s2403
          %s2406 = sshll.u32 [#allocation5], 4
          %s2407 = int_to_ptr.vmem [resolvable:$true] %s2406
          %2409 = dma.vmem_to_hbm [thread:$0]  %s2407, 512, %s3, [#allocation6]
        $region48: #{congestion_forward.1} parent=31 // pred_fallthru
          _
        // Predicated region
        $region49: #{congestion_forward.1} parent=31 // pred_check
          %p2410 = pneg %p96
        $region50: #{congestion_forward.1} parent=31 // pred_check_branch
          %2412 = sbr.rel (%p2410) target = $region52
        $region51: #{congestion_forward.1} parent=31 // pred_region
          %2413 = dma.done [#allocation6], 512
        $region52: #{congestion_forward.1} parent=31 // pred_fallthru
          _
      $region32: #{congestion_forward.1} parent=5 // pred_fallthru
        _
      %p2414 = scmp.le.s32.totalorder 2, %s10
      // Predicated region
      $region53: #{congestion_forward.1} parent=5 // pred_check
        %p2415 = pneg %p2414
      $region54: #{congestion_forward.1} parent=5 // pred_check_branch
        %2417 = sbr.rel (%p2415) target = $region56
      $region55: #{congestion_forward.1} parent=5 // pred_region
        %s2418 = ssub.s32 %s10, 2
      $region56: #{congestion_forward.1} parent=5 // pred_fallthru
        _
    $region6: #{congestion_forward.1} parent=1 // loop_footer
      %s14 = sadd.s32 1, %s10
    $region7: #{congestion_forward.1} parent=1 // loop_footer_branch
      %9 = sbr.rel target = $region3
    $region8: #{congestion_forward.1} parent=1 // loop_exit
      _
    %2419 = vsyncpa [#allocation6], 1
    %s2420 = scalar_lea.sflag [#allocation6], 1
    %2421 = vsyncpa %s2420, 1

</llo_original>
